<compile_context>
chip_gen: v7x
topology: tpu7x:2x2x1
jax: 0.10.0
libtpu: 0.0.40
codegen_flags: <defaults>
</compile_context>

<pallas_src>
import jax
import jax.numpy as jnp
from jax.experimental import pallas as pl
from jax.experimental.pallas import tpu as pltpu

_TINY_BYTES = 512 * 1024  # per-operand crossover to the fused-jnp fallback


def _round_up(x, m):
    return ((x + m - 1) // m) * m


def _sublane_granularity(itemsize):
    # f32 -> 8, bf16 -> 16, int8/fp8 -> 32 (matches packed sublane tiling)
    return max(8, 32 // int(itemsize))


def _vmem_capacity_bytes():
    try:
        return int(pltpu.get_tpu_info().vmem_capacity_bytes)
    except Exception:  # defensive: older jax / non-TPU trace
        return None


def _make_kernel(D, td, need_d_mask):
    """grid = (batch_tiles, d_tiles); reduction axis last."""

    def kernel(a_ref, b_ref, o_ref, acc_ref):
        k = pl.program_id(1)

        @pl.when(k == 0)
        def _():
            acc_ref[...] = jnp.zeros_like(acc_ref)

        prod = a_ref[...].astype(jnp.float32) * b_ref[...].astype(jnp.float32)
        if need_d_mask:
            # Ragged reduction tail: rows >= D hold garbage from the partial
            # block DMA; zero them so they add nothing to the dot product.
            row = jax.lax.broadcasted_iota(jnp.int32, prod.shape, 0) + k * td
            prod = jnp.where(row < D, prod, 0.0)

        # Fold (td, tb) down to (8, tb) with plain vreg adds (VPU only); the
        # sublane (XLU) reduce + (1, tb) masked store is deferred to the end.
        tb = prod.shape[1]
        acc_ref[...] += jnp.sum(prod.reshape(td // 8, 8, tb), axis=0)

        @pl.when(k == pl.num_programs(1) - 1)
        def _():
            o_ref[...] = jnp.sum(acc_ref[...], axis=0, keepdims=True).astype(o_ref.dtype)

    return kernel


def dot_product_edge_decoder(embeds1, embeds2, rel=None):
    """Pallas equivalent of DotProductEdgeDecoder.forward.

    embeds1, embeds2: (embed_dim, batch).  Returns (batch,) dot products.
    """
    del rel  # unused by the reference module's computation
    assert embeds1.ndim == 2 and embeds1.shape == embeds2.shape
    assert embeds1.dtype == embeds2.dtype
    D, B = embeds1.shape
    dtype = embeds1.dtype
    itemsize = jnp.dtype(dtype).itemsize
    sub = _sublane_granularity(itemsize)

    # Small / skinny inputs: XLA's fused reduce is already at roofline and can
    # fuse with neighbours; a pallas_call would only add dispatch overhead.
    if (embeds1.size * itemsize < _TINY_BYTES) or D < sub or B < 128:
        return jnp.sum(embeds1 * embeds2, axis=0)

    # ---- per-generation tile budget (memory bound => tile bytes is THE lever)
    vmem_cap = _vmem_capacity_bytes()
    if vmem_cap is not None and vmem_cap >= 96 * 1024 * 1024:
        # v5e / v6e: 128 MiB physical VMEM.  4 MiB per input tile => ~16 MiB
        # live (2 inputs x 2 pipeline buffers); raise the scoped limit past
        # v5e's 16 MiB default.
        tile_cap_bytes = 4 * 1024 * 1024
        vmem_limit = 40 * 1024 * 1024
    else:
        # v7x (64 MiB physical) or unknown generation: ~8 MiB live fits every
        # scoped default without touching vmem_limit_bytes.
        tile_cap_bytes = 2 * 1024 * 1024
        vmem_limit = None

    # ---- lane (batch) tile: multiple of 128; keep >= 2 tiles when B > 128 so
    # the "parallel" axis actually feeds both v7x TensorCores.
    tb = min(_round_up(B, 128), 512)
    if (B + tb - 1) // tb < 2:
        tb = max(128, _round_up(tb // 2, 128))
    n_b = (B + tb - 1) // tb

    # ---- sublane (embed_dim / reduction) tile: dtype-aware byte cap.
    td = max(sub, (tile_cap_bytes // (tb * itemsize)) // sub * sub)
    td = min(td, _round_up(D, sub))
    n_d = (D + td - 1) // td
    need_d_mask = (D % td) != 0  # ragged reduction tail -> mask in-kernel

    grid = (n_b, n_d)
    in_spec = pl.BlockSpec((td, tb), lambda j, k: (k, j))
    out_spec = pl.BlockSpec((1, tb), lambda j, k: (0, j))

    cost = pl.CostEstimate(
        flops=2 * D * B,
        transcendentals=0,
        bytes_accessed=2 * D * B * itemsize + B * itemsize,
    )
    cp_kwargs = dict(dimension_semantics=("parallel", "arbitrary"))
    if vmem_limit is not None:
        cp_kwargs["vmem_limit_bytes"] = vmem_limit

    out = pl.pallas_call(
        _make_kernel(D, td, need_d_mask),
        out_shape=jax.ShapeDtypeStruct((1, B), dtype),
        grid_spec=pltpu.PrefetchScalarGridSpec(
            num_scalar_prefetch=0,
            grid=grid,
            in_specs=[in_spec, in_spec],
            out_specs=out_spec,
            scratch_shapes=[pltpu.VMEM((8, tb), jnp.float32)],
        ),
        compiler_params=pltpu.CompilerParams(**cp_kwargs),
        cost_estimate=cost,
    )(embeds1, embeds2)

    return out[0]


if __name__ == "__main__":
    key = jax.random.PRNGKey(0)
    ks = jax.random.split(key, 8)

    def check(e1, e2, name):
        out = jax.block_until_ready(dot_product_edge_decoder(e1, e2, rel=None))
        ref = jnp.sum(e1 * e2, axis=0)
        assert out.shape == (e1.shape[1],), f"{name}: bad shape {out.shape}"
        assert jnp.allclose(out, ref, rtol=1e-5, atol=2e-3), f"{name}: mismatch"

    # 1) Tiny netquery-style shape (embed_dim=32, batch=8): fused-jnp fallback.
    check(jax.random.normal(ks[0], (32, 8), jnp.float32),
          jax.random.normal(ks[1], (32, 8), jnp.float32), "tiny")

    # 2) Pallas path: 2 parallel batch tiles + a partial batch-tail block.
    check(jax.random.normal(ks[2], (768, 640), jnp.float32),
          jax.random.normal(ks[3], (768, 640), jnp.float32), "pallas")

    # 3) Fully unaligned shape: in-kernel reduction-tail mask + partial blocks
    #    in both dims (no wrapper jnp.pad copy).
    check(jax.random.normal(ks[4], (500, 700), jnp.float32),
          jax.random.normal(ks[5], (500, 700), jnp.float32), "ragged")

    # 4) Multi-step reduction: exercises the (8, tb) accumulator across k tiles.
    check(jax.random.normal(ks[6], (4096, 640), jnp.float32),
          jax.random.normal(ks[7], (4096, 640), jnp.float32), "deep")

    print("KERNEL_OK")
</pallas_src>

<mosaic_0001>
module attributes {stable_mosaic.version = 11 : i64} {
  func.func @kernel(%arg0: i32, %arg1: i32, %arg2: memref<768x512xf32, #tpu.memory_space<vmem>>, %arg3: memref<768x512xf32, #tpu.memory_space<vmem>>, %arg4: memref<1x512xf32, #tpu.memory_space<vmem>>, %arg5: memref<8x512xf32, #tpu.memory_space<vmem>>) attributes {dimension_semantics = [#tpu.dimension_semantics<parallel>, #tpu.dimension_semantics<arbitrary>], iteration_bounds = array<i64: 2, 1>, scalar_prefetch = 0 : i64, scratch_operands = 1 : i64, tpu.core_type = #tpu.core_type<tc>, window_params = [{transform_indices = @transform_0, window_bounds = array<i64: 768, 512>}, {transform_indices = @transform_1, window_bounds = array<i64: 768, 512>}, {transform_indices = @transform_2, window_bounds = array<i64: 1, 512>}]} {
    %c0_i32 = arith.constant 0 : i32
    %0 = arith.cmpi eq, %arg1, %c0_i32 : i32
    %1 = arith.extui %0 : i1 to i32
    %c0_i32_0 = arith.constant 0 : i32
    %2 = arith.cmpi ne, %1, %c0_i32_0 : i32
    scf.if %2 {
      %cst_10 = arith.constant 0.000000e+00 : f32
      %14 = vector.broadcast %cst_10 : f32 to vector<8x512xf32>
      %c0_11 = arith.constant 0 : index
      %c0_12 = arith.constant 0 : index
      %15 = vector.load %arg5[%c0_11, %c0_12] : memref<8x512xf32, #tpu.memory_space<vmem>>, vector<8x512xf32>
      tpu.vector_store %arg5[%c0_11, %c0_12], %14 {strides = array<i32>} : memref<8x512xf32, #tpu.memory_space<vmem>>, vector<8x512xf32>,
    } else {
    }
    %c0 = arith.constant 0 : index
    %c0_1 = arith.constant 0 : index
    %3 = vector.load %arg2[%c0, %c0_1] : memref<768x512xf32, #tpu.memory_space<vmem>>, vector<768x512xf32>
    %c0_2 = arith.constant 0 : index
    %c0_3 = arith.constant 0 : index
    %4 = vector.load %arg3[%c0_2, %c0_3] : memref<768x512xf32, #tpu.memory_space<vmem>>, vector<768x512xf32>
    %5 = arith.mulf %3, %4 : vector<768x512xf32>
    %c0_4 = arith.constant 0 : index
    %c0_5 = arith.constant 0 : index
    %6 = vector.load %arg5[%c0_4, %c0_5] : memref<8x512xf32, #tpu.memory_space<vmem>>, vector<8x512xf32>
    %7 = vector.shape_cast %5 : vector<768x512xf32> to vector<96x8x512xf32>
    %cst = arith.constant dense<0.000000e+00> : vector<8x512xf32>
    %8 = vector.multi_reduction <add>, %7, %cst [0] : vector<96x8x512xf32> to vector<8x512xf32>
    %9 = arith.addf %6, %8 : vector<8x512xf32>
    %c0_6 = arith.constant 0 : index
    %c0_7 = arith.constant 0 : index
    %10 = vector.load %arg5[%c0_6, %c0_7] : memref<8x512xf32, #tpu.memory_space<vmem>>, vector<8x512xf32>
    tpu.vector_store %arg5[%c0_6, %c0_7], %9 {strides = array<i32>} : memref<8x512xf32, #tpu.memory_space<vmem>>, vector<8x512xf32>,
    %c0_i32_8 = arith.constant 0 : i32
    %11 = arith.cmpi eq, %arg1, %c0_i32_8 : i32
    %12 = arith.extui %11 : i1 to i32
    %c0_i32_9 = arith.constant 0 : i32
    %13 = arith.cmpi ne, %12, %c0_i32_9 : i32
    scf.if %13 {
      %c0_10 = arith.constant 0 : index
      %c0_11 = arith.constant 0 : index
      %14 = vector.load %arg5[%c0_10, %c0_11] : memref<8x512xf32, #tpu.memory_space<vmem>>, vector<8x512xf32>
      %cst_12 = arith.constant dense<0.000000e+00> : vector<512xf32>
      %15 = vector.multi_reduction <add>, %14, %cst_12 [0] : vector<8x512xf32> to vector<512xf32>
      %16 = vector.shape_cast %15 : vector<512xf32> to vector<1x512xf32>
      %c0_13 = arith.constant 0 : index
      %c0_14 = arith.constant 0 : index
      %17 = vector.load %arg4[%c0_13, %c0_14] : memref<1x512xf32, #tpu.memory_space<vmem>>, vector<1x512xf32>
      tpu.vector_store %arg4[%c0_13, %c0_14], %16 {strides = array<i32>} : memref<1x512xf32, #tpu.memory_space<vmem>>, vector<1x512xf32>,
    } else {
    }
    return
  }
  func.func @transform_0(%arg0: i32, %arg1: i32) -> (i32, i32) {
    %c0_i32 = arith.constant 0 : i32
    return %arg1, %arg0 : i32, i32
  }
  func.func @transform_1(%arg0: i32, %arg1: i32) -> (i32, i32) {
    %c0_i32 = arith.constant 0 : i32
    return %arg1, %arg0 : i32, i32
  }
  func.func @transform_2(%arg0: i32, %arg1: i32) -> (i32, i32) {
    %c0_i32 = arith.constant 0 : i32
    %c0_i32_0 = arith.constant 0 : i32
    return %c0_i32, %arg0 : i32, i32
  }
}

</mosaic_0001>

<llo_original>
// kernel: tpu_custom_call.1
$region0: #{tpu_custom_call.1}
  #allocation0 [shape = 'u32[]', space=smem, size = 0x4, offset = 0x4, fixed_abs, tag = 'smem constant byte address 0x4 - core index']
  #allocation1 [shape = 'u32[144,128]{1,0:T(1,128)}', space=vmem, size = 0x12000, scoped, tag = 'internal scratch']
  #allocation2 [shape = 'f32[8,512]{1,0:T(8,128)}', space=vmem, size = 0x4000, scoped, tag = 'scratch operand']
  %s0 = inlined_call_operand.hbm [shape: f32[768,640], index: 0, kind: input, shape index: {}]
  %s1 = inlined_call_operand.hbm [shape: f32[768,640], index: 1, kind: input, shape index: {}]
  %s2 = inlined_call_operand.hbm [shape: f32[1,640], index: 2, kind: output, shape index: {}]
  %s3 = sld [smem:[#allocation0]]
  $region57: #{tpu_custom_call.1} parent=0
    _
  %s5 = ssub.s32 1, %s3
  %s6 = scalar_select 0, %s5, %s3
  $region1: #{tpu_custom_call.1} parent=0
    #allocation3 [shape = 'u8[3145728]{0}', space=vmem, size = 0x300000, scoped, tag = 'input window, operand 0']
    #allocation4 [shape = 's32[2]{0}', space=sflag, size = 0x8, scoped, tag = 'scoped memory for tpu_custom_call.1']
    #allocation5 [shape = 's32[2]{0}', space=sflag, size = 0x8, scoped, tag = 'scoped memory for tpu_custom_call.1']
    #allocation6 [shape = 'u8[3145728]{0}', space=vmem, size = 0x300000, scoped, tag = 'input window, operand 1']
    #allocation7 [shape = 's32[2]{0}', space=sflag, size = 0x8, scoped, tag = 'scoped memory for tpu_custom_call.1']
    #allocation8 [shape = 'u8[4096]{0}', space=vmem, size = 0x1000, scoped, tag = 'output window, operand 0']
    %7 = vsyncpa [#allocation4], 0
    %s8 = scalar_lea.sflag [#allocation4], 1
    %9 = vsyncpa %s8, 0
    %10 = vsyncpa [#allocation7], 0
    %s11 = scalar_lea.sflag [#allocation7], 1
    %12 = vsyncpa %s11, 0
    %13 = vsyncpa [#allocation5], 0
    %s14 = scalar_lea.sflag [#allocation5], 1
    %15 = vsyncpa %s14, 0
    loop: start=0, step=1, limit=4
    $region2: #{tpu_custom_call.1} parent=1 // loop_pre_header
      _
    $region3: #{tpu_custom_call.1} parent=1 // loop_header
      %s17 = sphi 0, %s21
      %p18 = scmp.ge.s32.totalorder %s17, 4
      %s24 = sphi 0, %s36
      %s25 = sphi 0, %s32
      %s26 = sphi 0, %s24
      %s27 = sphi 0, %s25
      %s28 = sphi 0, %s26
      %s29 = sphi 0, %s27
      %s41 = sphi 0, %s43
      %s44 = sphi 0, %s41
      %s45 = sphi 0, %s44
      %s61 = sphi 0, %s45
      %s69 = sphi 0, %s71
      %s72 = sphi 0, %s69
      %s73 = sphi 0, %s72
      %s89 = sphi 0, %s73
      %s95 = sphi 0, %s97
      %s98 = sphi 0, %s95
      %s99 = sphi 0, %s98
      %s115 = sphi 0, %s99
    $region4: #{tpu_custom_call.1} parent=1 // loop_header_branch
      %20 = sbr.rel (%p18) target = $region8
    $region5: #{tpu_custom_call.1} parent=1 // loop_body
      %s22 = ssub.s32 %s17, 1
      %s23 = ssub.s32 %s17, 2
      %s30 = sadd.s32 1, %s25
      %p31 = scmp.ge.s32.totalorder %s30, 1
      %s32 = scalar_select %p31, 0, %s30
      %s33 = sadd.s32 1, %s24
      %s34 = scalar_select %p31, %s33, %s24
      %p35 = scmp.ge.s32.totalorder %s34, 2
      %s36 = scalar_select %p35, 0, %s34
      %s37 = ssub.s32 %s25, %s32
      %s38 = ssub.s32 %s24, %s36
      %s39 = sor.u32 %s37, %s38
      %p40 = scmp.eq.s32.totalorder %s39, 0
      %s42 = sadd.s32 %s41, 1
      %s43 = scalar_select %p40, %s41, %s42
      %p46 = pneg %p40
      %p47 = scmp.eq.s32.totalorder %s17, 1
      %p48 = por %p46, %p47
      %p49 = scmp.ne.s32.totalorder %s41, %s44
      %p50 = scmp.eq.s32.totalorder %s17, 0
      %p51 = por %p49, %p50
      %p52 = scmp.ne.s32.totalorder %s41, %s44
      %p53 = scmp.eq.s32.totalorder %s22, 1
      %p54 = por %p52, %p53
      %p55 = scmp.ne.s32.totalorder %s44, %s45
      %p56 = scmp.eq.s32.totalorder %s22, 0
      %p57 = por %p55, %p56
      %p58 = scmp.ne.s32.totalorder %s44, %s45
      %p59 = scmp.eq.s32.totalorder %s23, 1
      %p60 = por %p58, %p59
      %p62 = scmp.ne.s32.totalorder %s45, %s61
      %p63 = scmp.eq.s32.totalorder %s23, 0
      %p64 = por %p62, %p63
      %s65 = ssub.s32 %s25, %s32
      %s66 = ssub.s32 %s24, %s36
      %s67 = sor.u32 %s65, %s66
      %p68 = scmp.eq.s32.totalorder %s67, 0
      %s70 = sadd.s32 %s69, 1
      %s71 = scalar_select %p68, %s69, %s70
      %p74 = pneg %p68
      %p75 = scmp.eq.s32.totalorder %s17, 1
      %p76 = por %p74, %p75
      %p77 = scmp.ne.s32.totalorder %s69, %s72
      %p78 = scmp.eq.s32.totalorder %s17, 0
      %p79 = por %p77, %p78
      %p80 = scmp.ne.s32.totalorder %s69, %s72
      %p81 = scmp.eq.s32.totalorder %s22, 1
      %p82 = por %p80, %p81
      %p83 = scmp.ne.s32.totalorder %s72, %s73
      %p84 = scmp.eq.s32.totalorder %s22, 0
      %p85 = por %p83, %p84
      %p86 = scmp.ne.s32.totalorder %s72, %s73
      %p87 = scmp.eq.s32.totalorder %s23, 1
      %p88 = por %p86, %p87
      %p90 = scmp.ne.s32.totalorder %s73, %s89
      %p91 = scmp.eq.s32.totalorder %s23, 0
      %p92 = por %p90, %p91
      %s93 = ssub.s32 %s24, %s36
      %p94 = scmp.eq.s32.totalorder %s93, 0
      %s96 = sadd.s32 %s95, 1
      %s97 = scalar_select %p94, %s95, %s96
      %p100 = pneg %p94
      %p101 = scmp.eq.s32.totalorder %s17, 1
      %p102 = por %p100, %p101
      %p103 = scmp.ne.s32.totalorder %s95, %s98
      %p104 = scmp.eq.s32.totalorder %s17, 0
      %p105 = por %p103, %p104
      %p106 = scmp.ne.s32.totalorder %s95, %s98
      %p107 = scmp.eq.s32.totalorder %s22, 1
      %p108 = por %p106, %p107
      %p109 = scmp.ne.s32.totalorder %s98, %s99
      %p110 = scmp.eq.s32.totalorder %s22, 0
      %p111 = por %p109, %p110
      %p112 = scmp.ne.s32.totalorder %s98, %s99
      %p113 = scmp.eq.s32.totalorder %s23, 1
      %p114 = por %p112, %p113
      %p116 = scmp.ne.s32.totalorder %s99, %s115
      %p117 = scmp.eq.s32.totalorder %s23, 0
      %p118 = por %p116, %p117
      %p119 = scmp.le.s32.totalorder 1, %s17
      %p120 = scmp.lt.s32.totalorder %s17, 3
      %p121 = pnand %p119, %p120
      %p122 = pneg %p121
      // Predicated region
      $region9: #{tpu_custom_call.1} parent=5 // pred_check
        _
      $region10: #{tpu_custom_call.1} parent=5 // pred_check_branch
        %124 = sbr.rel (%p121) target = $region12
      $region11: #{tpu_custom_call.1} parent=5 // pred_region
        %s125 = ssub.s32 %s17, 1
      $region12: #{tpu_custom_call.1} parent=5 // pred_fallthru
        _
      %p126 = scmp.lt.s32.totalorder %s17, 2
      // Predicated region
      $region13: #{tpu_custom_call.1} parent=5 // pred_check
        %p127 = pneg %p126
      $region14: #{tpu_custom_call.1} parent=5 // pred_check_branch
        %129 = sbr.rel (%p127) target = $region16
      $region15: #{tpu_custom_call.1} parent=5 // pred_region
        // Predicated region
        $region17: #{tpu_custom_call.1} parent=15 // pred_check
          %p130 = pneg %p51
        $region18: #{tpu_custom_call.1} parent=15 // pred_check_branch
          %132 = sbr.rel (%p130) target = $region20
        $region19: #{tpu_custom_call.1} parent=15 // pred_region
          %s133 = sand.u32 %s41, 1
          %s134 = scalar_lea.sflag [#allocation4], %s133
          %s135 = sand.u32 %s41, 1
          %s136 = smul.addr %s135, 3072
          %s137 = scalar_lea.vmem [#allocation3], %s136
          %s138 = smul.u32 96, %s25
          %s139 = smul.u32 4, %s24
          %s140 = ssub.s32 5, %s139
          %p141 = scmp.lt.s32.totalorder %s140, 4
          %s142 = scalar_select %p141, %s140, 4
          %s143 = smul.u32 12288, %s142
          %s145 = ssub.s32 49152, %s143
          %146 = vsyncadd %s134, %s145
          %p147 = scmp.ne.s32.totalorder 0, %s143
          %s148 = smul.addr %s138, 5
          %s149 = sadd.s32 %s139, %s148
          %s150 = smul.addr %s149, 128
          %s151 = scalar_lea.hbm %s0, %s150
          %s152 = smul.u32 %s142, 8
          %s153 = smul.u32 %s152, 96
          %s154 = sshll.u32 %s137, 4
          %s155 = int_to_ptr.vmem [resolvable:$true] %s154
          %s156 = sshll.u32 %s153, 4
          %160 = dma.hbm_to_vmem [thread:$0]  (%p147), %s151, %s156, %s155, %s134, 640, 512, %s152
        $region20: #{tpu_custom_call.1} parent=15 // pred_fallthru
          _
        // Predicated region
        $region21: #{tpu_custom_call.1} parent=15 // pred_check
          %p161 = pneg %p79
        $region22: #{tpu_custom_call.1} parent=15 // pred_check_branch
          %163 = sbr.rel (%p161) target = $region24
        $region23: #{tpu_custom_call.1} parent=15 // pred_region
          %s164 = sand.u32 %s69, 1
          %s165 = scalar_lea.sflag [#allocation7], %s164
          %s166 = sand.u32 %s69, 1
          %s167 = smul.addr %s166, 3072
          %s168 = scalar_lea.vmem [#allocation6], %s167
          %s169 = smul.u32 96, %s25
          %s170 = smul.u32 4, %s24
          %s171 = ssub.s32 5, %s170
          %p172 = scmp.lt.s32.totalorder %s171, 4
          %s173 = scalar_select %p172, %s171, 4
          %s174 = smul.u32 12288, %s173
          %s176 = ssub.s32 49152, %s174
          %177 = vsyncadd %s165, %s176
          %p178 = scmp.ne.s32.totalorder 0, %s174
          %s179 = smul.addr %s169, 5
          %s180 = sadd.s32 %s170, %s179
          %s181 = smul.addr %s180, 128
          %s182 = scalar_lea.hbm %s1, %s181
          %s183 = smul.u32 %s173, 8
          %s184 = smul.u32 %s183, 96
          %s185 = sshll.u32 %s168, 4
          %s186 = int_to_ptr.vmem [resolvable:$true] %s185
          %s187 = sshll.u32 %s184, 4
          %191 = dma.hbm_to_vmem [thread:$0]  (%p178), %s182, %s187, %s186, %s165, 640, 512, %s183
        $region24: #{tpu_custom_call.1} parent=15 // pred_fallthru
          _
      $region16: #{tpu_custom_call.1} parent=5 // pred_fallthru
        _
      %p192 = scmp.le.s32.totalorder 1, %s17
      %p193 = scmp.lt.s32.totalorder %s17, 3
      %p194 = pnand %p192, %p193
      %p195 = pneg %p194
      // Predicated region
      $region25: #{tpu_custom_call.1} parent=5 // pred_check
        _
      $region26: #{tpu_custom_call.1} parent=5 // pred_check_branch
        %197 = sbr.rel (%p194) target = $region28
      $region27: #{tpu_custom_call.1} parent=5 // pred_region
        %s198 = ssub.s32 %s17, 1
        %s199 = sand.u32 %s44, 1
        %s200 = scalar_lea.sflag [#allocation4], %s199
        %s201 = sand.u32 %s44, 1
        %s202 = smul.addr %s201, 3072
        %s203 = scalar_lea.vmem [#allocation3], %s202
        // Predicated region
        $region29: #{tpu_custom_call.1} parent=27 // pred_check
          %p204 = pneg %p57
        $region30: #{tpu_custom_call.1} parent=27 // pred_check_branch
          %206 = sbr.rel (%p204) target = $region32
        $region31: #{tpu_custom_call.1} parent=27 // pred_region
          %207 = dma.done %s200, 49152
        $region32: #{tpu_custom_call.1} parent=27 // pred_fallthru
          _
        %s208 = sand.u32 %s72, 1
        %s209 = scalar_lea.sflag [#allocation7], %s208
        %s210 = sand.u32 %s72, 1
        %s211 = smul.addr %s210, 3072
        %s212 = scalar_lea.vmem [#allocation6], %s211
        // Predicated region
        $region33: #{tpu_custom_call.1} parent=27 // pred_check
          %p213 = pneg %p85
        $region34: #{tpu_custom_call.1} parent=27 // pred_check_branch
          %215 = sbr.rel (%p213) target = $region36
        $region35: #{tpu_custom_call.1} parent=27 // pred_region
          %216 = dma.done %s209, 49152
        $region36: #{tpu_custom_call.1} parent=27 // pred_fallthru
          _
        %s217 = sand.u32 %s44, 1
        %s218 = scalar_lea.sflag [#allocation4], %s217
        %s219 = sand.u32 %s44, 1
        %s220 = smul.addr %s219, 3072
        %s221 = scalar_lea.vmem [#allocation3], %s220
        %p222 = pneg %p57
        %p223 = pneg %p54
        %s224 = sand.u32 %s72, 1
        %s225 = scalar_lea.sflag [#allocation7], %s224
        %s226 = sand.u32 %s72, 1
        %s227 = smul.addr %s226, 3072
        %s228 = scalar_lea.vmem [#allocation6], %s227
        %p229 = pneg %p85
        %p230 = pneg %p82
        %p231 = pneg %p111
        %p232 = pneg %p108
        %s233 = sand.u32 %s98, 1
        %s234 = scalar_lea.sflag [#allocation5], %s233
        %s235 = sand.u32 %s98, 1
        %s236 = smul.addr %s235, 4
        %s237 = scalar_lea.vmem [#allocation8], %s236
        %s238 = smul.u32 96, %s27
        %s239 = smul.u32 4, %s26
        %s240 = ssub.s32 5, %s239
        %p241 = scmp.lt.s32.totalorder %s240, 4
        %s242 = scalar_select %p241, %s240, 4
        %s243 = smul.u32 12288, %s242
        %s244 = smul.u32 96, %s27
        %s245 = smul.u32 4, %s26
        %s246 = ssub.s32 5, %s245
        %p247 = scmp.lt.s32.totalorder %s246, 4
        %s248 = scalar_select %p247, %s246, 4
        %s249 = smul.u32 12288, %s248
        %s250 = smul.u32 4, %s26
        %s251 = ssub.s32 5, %s250
        %p252 = scmp.lt.s32.totalorder %s251, 4
        %s253 = scalar_select %p252, %s251, 4
        %s254 = smul.u32 16, %s253
        %p255 = scmp.eq.s32.totalorder %s27, 0
        // Predicated region
        $region37: #{tpu_custom_call.1} parent=27 // pred_check
          %p256 = pneg %p255
        $region38: #{tpu_custom_call.1} parent=27 // pred_check_branch
          %258 = sbr.rel (%p256) target = $region40
        $region39: #{tpu_custom_call.1} parent=27 // pred_region
          %259 = vst [vmem:[#allocation2] sm:$0xff] 0.0
          %260 = vst [vmem:[#allocation2 + $0x8] sm:$0xff] 0.0
          %261 = vst [vmem:[#allocation2 + $0x10] sm:$0xff] 0.0
          %262 = vst [vmem:[#allocation2 + $0x18] sm:$0xff] 0.0
        $region40: #{tpu_custom_call.1} parent=27 // pred_fallthru
          _
        %v263 = vld [vmem:[%s203] sm:$0xff]
        %v264 = vld [vmem:[%s203 + $0x8] sm:$0xff]
        %v265 = vld [vmem:[%s203 + $0x10] sm:$0xff]
        %v266 = vld [vmem:[%s203 + $0x18] sm:$0xff]
        %v267 = vld [vmem:[%s203 + $0x20] sm:$0xff]
        %v268 = vld [vmem:[%s203 + $0x28] sm:$0xff]
        %v269 = vld [vmem:[%s203 + $0x30] sm:$0xff]
        %v270 = vld [vmem:[%s203 + $0x38] sm:$0xff]
        %v271 = vld [vmem:[%s203 + $0x40] sm:$0xff]
        %v272 = vld [vmem:[%s203 + $0x48] sm:$0xff]
        %v273 = vld [vmem:[%s203 + $0x50] sm:$0xff]
        %v274 = vld [vmem:[%s203 + $0x58] sm:$0xff]
        %v275 = vld [vmem:[%s203 + $0x60] sm:$0xff]
        %v276 = vld [vmem:[%s203 + $0x68] sm:$0xff]
        %v277 = vld [vmem:[%s203 + $0x70] sm:$0xff]
        %v278 = vld [vmem:[%s203 + $0x78] sm:$0xff]
        %v279 = vld [vmem:[%s203 + $0x80] sm:$0xff]
        %v280 = vld [vmem:[%s203 + $0x88] sm:$0xff]
        %v281 = vld [vmem:[%s203 + $0x90] sm:$0xff]
        %v282 = vld [vmem:[%s203 + $0x98] sm:$0xff]
        %v283 = vld [vmem:[%s203 + $0xa0] sm:$0xff]
        %v284 = vld [vmem:[%s203 + $0xa8] sm:$0xff]
        %v285 = vld [vmem:[%s203 + $0xb0] sm:$0xff]
        %v286 = vld [vmem:[%s203 + $0xb8] sm:$0xff]
        %v287 = vld [vmem:[%s203 + $0xc0] sm:$0xff]
        %v288 = vld [vmem:[%s203 + $0xc8] sm:$0xff]
        %v289 = vld [vmem:[%s203 + $0xd0] sm:$0xff]
        %v290 = vld [vmem:[%s203 + $0xd8] sm:$0xff]
        %v291 = vld [vmem:[%s203 + $0xe0] sm:$0xff]
        %v292 = vld [vmem:[%s203 + $0xe8] sm:$0xff]
        %v293 = vld [vmem:[%s203 + $0xf0] sm:$0xff]
        %v294 = vld [vmem:[%s203 + $0xf8] sm:$0xff]
        %v295 = vld [vmem:[%s203 + $0x100] sm:$0xff]
        %v296 = vld [vmem:[%s203 + $0x108] sm:$0xff]
        %v297 = vld [vmem:[%s203 + $0x110] sm:$0xff]
        %v298 = vld [vmem:[%s203 + $0x118] sm:$0xff]
        %v299 = vld [vmem:[%s203 + $0x120] sm:$0xff]
        %v300 = vld [vmem:[%s203 + $0x128] sm:$0xff]
        %v301 = vld [vmem:[%s203 + $0x130] sm:$0xff]
        %v302 = vld [vmem:[%s203 + $0x138] sm:$0xff]
        %v303 = vld [vmem:[%s203 + $0x140] sm:$0xff]
        %v304 = vld [vmem:[%s203 + $0x148] sm:$0xff]
        %v305 = vld [vmem:[%s203 + $0x150] sm:$0xff]
        %v306 = vld [vmem:[%s203 + $0x158] sm:$0xff]
        %v307 = vld [vmem:[%s203 + $0x160] sm:$0xff]
        %v308 = vld [vmem:[%s203 + $0x168] sm:$0xff]
        %v309 = vld [vmem:[%s203 + $0x170] sm:$0xff]
        %v310 = vld [vmem:[%s203 + $0x178] sm:$0xff]
        %v311 = vld [vmem:[%s203 + $0x180] sm:$0xff]
        %v312 = vld [vmem:[%s203 + $0x188] sm:$0xff]
        %v313 = vld [vmem:[%s203 + $0x190] sm:$0xff]
        %v314 = vld [vmem:[%s203 + $0x198] sm:$0xff]
        %v315 = vld [vmem:[%s203 + $0x1a0] sm:$0xff]
        %v316 = vld [vmem:[%s203 + $0x1a8] sm:$0xff]
        %v317 = vld [vmem:[%s203 + $0x1b0] sm:$0xff]
        %v318 = vld [vmem:[%s203 + $0x1b8] sm:$0xff]
        %v319 = vld [vmem:[%s203 + $0x1c0] sm:$0xff]
        %v320 = vld [vmem:[%s203 + $0x1c8] sm:$0xff]
        %v321 = vld [vmem:[%s203 + $0x1d0] sm:$0xff]
        %v322 = vld [vmem:[%s203 + $0x1d8] sm:$0xff]
        %v323 = vld [vmem:[%s203 + $0x1e0] sm:$0xff]
        %v324 = vld [vmem:[%s203 + $0x1e8] sm:$0xff]
        %v325 = vld [vmem:[%s203 + $0x1f0] sm:$0xff]
        %v326 = vld [vmem:[%s203 + $0x1f8] sm:$0xff]
        %v327 = vld [vmem:[%s203 + $0x200] sm:$0xff]
        %v328 = vld [vmem:[%s203 + $0x208] sm:$0xff]
        %v329 = vld [vmem:[%s203 + $0x210] sm:$0xff]
        %v330 = vld [vmem:[%s203 + $0x218] sm:$0xff]
        %v331 = vld [vmem:[%s203 + $0x220] sm:$0xff]
        %v332 = vld [vmem:[%s203 + $0x228] sm:$0xff]
        %v333 = vld [vmem:[%s203 + $0x230] sm:$0xff]
        %v334 = vld [vmem:[%s203 + $0x238] sm:$0xff]
        %v335 = vld [vmem:[%s203 + $0x240] sm:$0xff]
        %v336 = vld [vmem:[%s203 + $0x248] sm:$0xff]
        %v337 = vld [vmem:[%s203 + $0x250] sm:$0xff]
        %v338 = vld [vmem:[%s203 + $0x258] sm:$0xff]
        %v339 = vld [vmem:[%s203 + $0x260] sm:$0xff]
        %v340 = vld [vmem:[%s203 + $0x268] sm:$0xff]
        %v341 = vld [vmem:[%s203 + $0x270] sm:$0xff]
        %v342 = vld [vmem:[%s203 + $0x278] sm:$0xff]
        %v343 = vld [vmem:[%s203 + $0x280] sm:$0xff]
        %v344 = vld [vmem:[%s203 + $0x288] sm:$0xff]
        %v345 = vld [vmem:[%s203 + $0x290] sm:$0xff]
        %v346 = vld [vmem:[%s203 + $0x298] sm:$0xff]
        %v347 = vld [vmem:[%s203 + $0x2a0] sm:$0xff]
        %v348 = vld [vmem:[%s203 + $0x2a8] sm:$0xff]
        %v349 = vld [vmem:[%s203 + $0x2b0] sm:$0xff]
        %v350 = vld [vmem:[%s203 + $0x2b8] sm:$0xff]
        %v351 = vld [vmem:[%s203 + $0x2c0] sm:$0xff]
        %v352 = vld [vmem:[%s203 + $0x2c8] sm:$0xff]
        %v353 = vld [vmem:[%s203 + $0x2d0] sm:$0xff]
        %v354 = vld [vmem:[%s203 + $0x2d8] sm:$0xff]
        %v355 = vld [vmem:[%s203 + $0x2e0] sm:$0xff]
        %v356 = vld [vmem:[%s203 + $0x2e8] sm:$0xff]
        %v357 = vld [vmem:[%s203 + $0x2f0] sm:$0xff]
        %v358 = vld [vmem:[%s203 + $0x2f8] sm:$0xff]
        %v359 = vld [vmem:[%s203 + $0x300] sm:$0xff]
        %v360 = vld [vmem:[%s203 + $0x308] sm:$0xff]
        %v361 = vld [vmem:[%s203 + $0x310] sm:$0xff]
        %v362 = vld [vmem:[%s203 + $0x318] sm:$0xff]
        %v363 = vld [vmem:[%s203 + $0x320] sm:$0xff]
        %v364 = vld [vmem:[%s203 + $0x328] sm:$0xff]
        %v365 = vld [vmem:[%s203 + $0x330] sm:$0xff]
        %v366 = vld [vmem:[%s203 + $0x338] sm:$0xff]
        %v367 = vld [vmem:[%s203 + $0x340] sm:$0xff]
        %v368 = vld [vmem:[%s203 + $0x348] sm:$0xff]
        %v369 = vld [vmem:[%s203 + $0x350] sm:$0xff]
        %v370 = vld [vmem:[%s203 + $0x358] sm:$0xff]
        %v371 = vld [vmem:[%s203 + $0x360] sm:$0xff]
        %v372 = vld [vmem:[%s203 + $0x368] sm:$0xff]
        %v373 = vld [vmem:[%s203 + $0x370] sm:$0xff]
        %v374 = vld [vmem:[%s203 + $0x378] sm:$0xff]
        %v375 = vld [vmem:[%s203 + $0x380] sm:$0xff]
        %v376 = vld [vmem:[%s203 + $0x388] sm:$0xff]
        %v377 = vld [vmem:[%s203 + $0x390] sm:$0xff]
        %v378 = vld [vmem:[%s203 + $0x398] sm:$0xff]
        %v379 = vld [vmem:[%s203 + $0x3a0] sm:$0xff]
        %v380 = vld [vmem:[%s203 + $0x3a8] sm:$0xff]
        %v381 = vld [vmem:[%s203 + $0x3b0] sm:$0xff]
        %v382 = vld [vmem:[%s203 + $0x3b8] sm:$0xff]
        %v383 = vld [vmem:[%s203 + $0x3c0] sm:$0xff]
        %v384 = vld [vmem:[%s203 + $0x3c8] sm:$0xff]
        %v385 = vld [vmem:[%s203 + $0x3d0] sm:$0xff]
        %v386 = vld [vmem:[%s203 + $0x3d8] sm:$0xff]
        %v387 = vld [vmem:[%s203 + $0x3e0] sm:$0xff]
        %v388 = vld [vmem:[%s203 + $0x3e8] sm:$0xff]
        %v389 = vld [vmem:[%s203 + $0x3f0] sm:$0xff]
        %v390 = vld [vmem:[%s203 + $0x3f8] sm:$0xff]
        %v391 = vld [vmem:[%s203 + $0x400] sm:$0xff]
        %v392 = vld [vmem:[%s203 + $0x408] sm:$0xff]
        %v393 = vld [vmem:[%s203 + $0x410] sm:$0xff]
        %v394 = vld [vmem:[%s203 + $0x418] sm:$0xff]
        %v395 = vld [vmem:[%s203 + $0x420] sm:$0xff]
        %v396 = vld [vmem:[%s203 + $0x428] sm:$0xff]
        %v397 = vld [vmem:[%s203 + $0x430] sm:$0xff]
        %v398 = vld [vmem:[%s203 + $0x438] sm:$0xff]
        %v399 = vld [vmem:[%s203 + $0x440] sm:$0xff]
        %v400 = vld [vmem:[%s203 + $0x448] sm:$0xff]
        %v401 = vld [vmem:[%s203 + $0x450] sm:$0xff]
        %v402 = vld [vmem:[%s203 + $0x458] sm:$0xff]
        %v403 = vld [vmem:[%s203 + $0x460] sm:$0xff]
        %v404 = vld [vmem:[%s203 + $0x468] sm:$0xff]
        %v405 = vld [vmem:[%s203 + $0x470] sm:$0xff]
        %v406 = vld [vmem:[%s203 + $0x478] sm:$0xff]
        %v407 = vld [vmem:[%s203 + $0x480] sm:$0xff]
        %v408 = vld [vmem:[%s203 + $0x488] sm:$0xff]
        %v409 = vld [vmem:[%s203 + $0x490] sm:$0xff]
        %v410 = vld [vmem:[%s203 + $0x498] sm:$0xff]
        %v411 = vld [vmem:[%s203 + $0x4a0] sm:$0xff]
        %v412 = vld [vmem:[%s203 + $0x4a8] sm:$0xff]
        %v413 = vld [vmem:[%s203 + $0x4b0] sm:$0xff]
        %v414 = vld [vmem:[%s203 + $0x4b8] sm:$0xff]
        %v415 = vld [vmem:[%s203 + $0x4c0] sm:$0xff]
        %v416 = vld [vmem:[%s203 + $0x4c8] sm:$0xff]
        %v417 = vld [vmem:[%s203 + $0x4d0] sm:$0xff]
        %v418 = vld [vmem:[%s203 + $0x4d8] sm:$0xff]
        %v419 = vld [vmem:[%s203 + $0x4e0] sm:$0xff]
        %v420 = vld [vmem:[%s203 + $0x4e8] sm:$0xff]
        %v421 = vld [vmem:[%s203 + $0x4f0] sm:$0xff]
        %v422 = vld [vmem:[%s203 + $0x4f8] sm:$0xff]
        %v423 = vld [vmem:[%s203 + $0x500] sm:$0xff]
        %v424 = vld [vmem:[%s203 + $0x508] sm:$0xff]
        %v425 = vld [vmem:[%s203 + $0x510] sm:$0xff]
        %v426 = vld [vmem:[%s203 + $0x518] sm:$0xff]
        %v427 = vld [vmem:[%s203 + $0x520] sm:$0xff]
        %v428 = vld [vmem:[%s203 + $0x528] sm:$0xff]
        %v429 = vld [vmem:[%s203 + $0x530] sm:$0xff]
        %v430 = vld [vmem:[%s203 + $0x538] sm:$0xff]
        %v431 = vld [vmem:[%s203 + $0x540] sm:$0xff]
        %v432 = vld [vmem:[%s203 + $0x548] sm:$0xff]
        %v433 = vld [vmem:[%s203 + $0x550] sm:$0xff]
        %v434 = vld [vmem:[%s203 + $0x558] sm:$0xff]
        %v435 = vld [vmem:[%s203 + $0x560] sm:$0xff]
        %v436 = vld [vmem:[%s203 + $0x568] sm:$0xff]
        %v437 = vld [vmem:[%s203 + $0x570] sm:$0xff]
        %v438 = vld [vmem:[%s203 + $0x578] sm:$0xff]
        %v439 = vld [vmem:[%s203 + $0x580] sm:$0xff]
        %v440 = vld [vmem:[%s203 + $0x588] sm:$0xff]
        %v441 = vld [vmem:[%s203 + $0x590] sm:$0xff]
        %v442 = vld [vmem:[%s203 + $0x598] sm:$0xff]
        %v443 = vld [vmem:[%s203 + $0x5a0] sm:$0xff]
        %v444 = vld [vmem:[%s203 + $0x5a8] sm:$0xff]
        %v445 = vld [vmem:[%s203 + $0x5b0] sm:$0xff]
        %v446 = vld [vmem:[%s203 + $0x5b8] sm:$0xff]
        %v447 = vld [vmem:[%s203 + $0x5c0] sm:$0xff]
        %v448 = vld [vmem:[%s203 + $0x5c8] sm:$0xff]
        %v449 = vld [vmem:[%s203 + $0x5d0] sm:$0xff]
        %v450 = vld [vmem:[%s203 + $0x5d8] sm:$0xff]
        %v451 = vld [vmem:[%s203 + $0x5e0] sm:$0xff]
        %v452 = vld [vmem:[%s203 + $0x5e8] sm:$0xff]
        %v453 = vld [vmem:[%s203 + $0x5f0] sm:$0xff]
        %v454 = vld [vmem:[%s203 + $0x5f8] sm:$0xff]
        %v455 = vld [vmem:[%s203 + $0x600] sm:$0xff]
        %v456 = vld [vmem:[%s203 + $0x608] sm:$0xff]
        %v457 = vld [vmem:[%s203 + $0x610] sm:$0xff]
        %v458 = vld [vmem:[%s203 + $0x618] sm:$0xff]
        %v459 = vld [vmem:[%s203 + $0x620] sm:$0xff]
        %v460 = vld [vmem:[%s203 + $0x628] sm:$0xff]
        %v461 = vld [vmem:[%s203 + $0x630] sm:$0xff]
        %v462 = vld [vmem:[%s203 + $0x638] sm:$0xff]
        %v463 = vld [vmem:[%s203 + $0x640] sm:$0xff]
        %v464 = vld [vmem:[%s203 + $0x648] sm:$0xff]
        %v465 = vld [vmem:[%s203 + $0x650] sm:$0xff]
        %v466 = vld [vmem:[%s203 + $0x658] sm:$0xff]
        %v467 = vld [vmem:[%s203 + $0x660] sm:$0xff]
        %v468 = vld [vmem:[%s203 + $0x668] sm:$0xff]
        %v469 = vld [vmem:[%s203 + $0x670] sm:$0xff]
        %v470 = vld [vmem:[%s203 + $0x678] sm:$0xff]
        %v471 = vld [vmem:[%s203 + $0x680] sm:$0xff]
        %v472 = vld [vmem:[%s203 + $0x688] sm:$0xff]
        %v473 = vld [vmem:[%s203 + $0x690] sm:$0xff]
        %v474 = vld [vmem:[%s203 + $0x698] sm:$0xff]
        %v475 = vld [vmem:[%s203 + $0x6a0] sm:$0xff]
        %v476 = vld [vmem:[%s203 + $0x6a8] sm:$0xff]
        %v477 = vld [vmem:[%s203 + $0x6b0] sm:$0xff]
        %v478 = vld [vmem:[%s203 + $0x6b8] sm:$0xff]
        %v479 = vld [vmem:[%s203 + $0x6c0] sm:$0xff]
        %v480 = vld [vmem:[%s203 + $0x6c8] sm:$0xff]
        %v481 = vld [vmem:[%s203 + $0x6d0] sm:$0xff]
        %v482 = vld [vmem:[%s203 + $0x6d8] sm:$0xff]
        %v483 = vld [vmem:[%s203 + $0x6e0] sm:$0xff]
        %v484 = vld [vmem:[%s203 + $0x6e8] sm:$0xff]
        %v485 = vld [vmem:[%s203 + $0x6f0] sm:$0xff]
        %v486 = vld [vmem:[%s203 + $0x6f8] sm:$0xff]
        %v487 = vld [vmem:[%s203 + $0x700] sm:$0xff]
        %v488 = vld [vmem:[%s203 + $0x708] sm:$0xff]
        %v489 = vld [vmem:[%s203 + $0x710] sm:$0xff]
        %v490 = vld [vmem:[%s203 + $0x718] sm:$0xff]
        %v491 = vld [vmem:[%s203 + $0x720] sm:$0xff]
        %v492 = vld [vmem:[%s203 + $0x728] sm:$0xff]
        %v493 = vld [vmem:[%s203 + $0x730] sm:$0xff]
        %v494 = vld [vmem:[%s203 + $0x738] sm:$0xff]
        %v495 = vld [vmem:[%s203 + $0x740] sm:$0xff]
        %v496 = vld [vmem:[%s203 + $0x748] sm:$0xff]
        %v497 = vld [vmem:[%s203 + $0x750] sm:$0xff]
        %v498 = vld [vmem:[%s203 + $0x758] sm:$0xff]
        %v499 = vld [vmem:[%s203 + $0x760] sm:$0xff]
        %v500 = vld [vmem:[%s203 + $0x768] sm:$0xff]
        %v501 = vld [vmem:[%s203 + $0x770] sm:$0xff]
        %v502 = vld [vmem:[%s203 + $0x778] sm:$0xff]
        %v503 = vld [vmem:[%s203 + $0x780] sm:$0xff]
        %v504 = vld [vmem:[%s203 + $0x788] sm:$0xff]
        %v505 = vld [vmem:[%s203 + $0x790] sm:$0xff]
        %v506 = vld [vmem:[%s203 + $0x798] sm:$0xff]
        %v507 = vld [vmem:[%s203 + $0x7a0] sm:$0xff]
        %v508 = vld [vmem:[%s203 + $0x7a8] sm:$0xff]
        %v509 = vld [vmem:[%s203 + $0x7b0] sm:$0xff]
        %v510 = vld [vmem:[%s203 + $0x7b8] sm:$0xff]
        %v511 = vld [vmem:[%s203 + $0x7c0] sm:$0xff]
        %v512 = vld [vmem:[%s203 + $0x7c8] sm:$0xff]
        %v513 = vld [vmem:[%s203 + $0x7d0] sm:$0xff]
        %v514 = vld [vmem:[%s203 + $0x7d8] sm:$0xff]
        %v515 = vld [vmem:[%s203 + $0x7e0] sm:$0xff]
        %v516 = vld [vmem:[%s203 + $0x7e8] sm:$0xff]
        %v517 = vld [vmem:[%s203 + $0x7f0] sm:$0xff]
        %v518 = vld [vmem:[%s203 + $0x7f8] sm:$0xff]
        %v519 = vld [vmem:[%s203 + $0x800] sm:$0xff]
        %v520 = vld [vmem:[%s203 + $0x808] sm:$0xff]
        %v521 = vld [vmem:[%s203 + $0x810] sm:$0xff]
        %v522 = vld [vmem:[%s203 + $0x818] sm:$0xff]
        %v523 = vld [vmem:[%s203 + $0x820] sm:$0xff]
        %v524 = vld [vmem:[%s203 + $0x828] sm:$0xff]
        %v525 = vld [vmem:[%s203 + $0x830] sm:$0xff]
        %v526 = vld [vmem:[%s203 + $0x838] sm:$0xff]
        %v527 = vld [vmem:[%s203 + $0x840] sm:$0xff]
        %v528 = vld [vmem:[%s203 + $0x848] sm:$0xff]
        %v529 = vld [vmem:[%s203 + $0x850] sm:$0xff]
        %v530 = vld [vmem:[%s203 + $0x858] sm:$0xff]
        %v531 = vld [vmem:[%s203 + $0x860] sm:$0xff]
        %v532 = vld [vmem:[%s203 + $0x868] sm:$0xff]
        %v533 = vld [vmem:[%s203 + $0x870] sm:$0xff]
        %v534 = vld [vmem:[%s203 + $0x878] sm:$0xff]
        %v535 = vld [vmem:[%s203 + $0x880] sm:$0xff]
        %v536 = vld [vmem:[%s203 + $0x888] sm:$0xff]
        %v537 = vld [vmem:[%s203 + $0x890] sm:$0xff]
        %v538 = vld [vmem:[%s203 + $0x898] sm:$0xff]
        %v539 = vld [vmem:[%s203 + $0x8a0] sm:$0xff]
        %v540 = vld [vmem:[%s203 + $0x8a8] sm:$0xff]
        %v541 = vld [vmem:[%s203 + $0x8b0] sm:$0xff]
        %v542 = vld [vmem:[%s203 + $0x8b8] sm:$0xff]
        %v543 = vld [vmem:[%s203 + $0x8c0] sm:$0xff]
        %v544 = vld [vmem:[%s203 + $0x8c8] sm:$0xff]
        %v545 = vld [vmem:[%s203 + $0x8d0] sm:$0xff]
        %v546 = vld [vmem:[%s203 + $0x8d8] sm:$0xff]
        %v547 = vld [vmem:[%s203 + $0x8e0] sm:$0xff]
        %v548 = vld [vmem:[%s203 + $0x8e8] sm:$0xff]
        %v549 = vld [vmem:[%s203 + $0x8f0] sm:$0xff]
        %v550 = vld [vmem:[%s203 + $0x8f8] sm:$0xff]
        %v551 = vld [vmem:[%s203 + $0x900] sm:$0xff]
        %v552 = vld [vmem:[%s203 + $0x908] sm:$0xff]
        %v553 = vld [vmem:[%s203 + $0x910] sm:$0xff]
        %v554 = vld [vmem:[%s203 + $0x918] sm:$0xff]
        %v555 = vld [vmem:[%s203 + $0x920] sm:$0xff]
        %v556 = vld [vmem:[%s203 + $0x928] sm:$0xff]
        %v557 = vld [vmem:[%s203 + $0x930] sm:$0xff]
        %v558 = vld [vmem:[%s203 + $0x938] sm:$0xff]
        %v559 = vld [vmem:[%s203 + $0x940] sm:$0xff]
        %v560 = vld [vmem:[%s203 + $0x948] sm:$0xff]
        %v561 = vld [vmem:[%s203 + $0x950] sm:$0xff]
        %v562 = vld [vmem:[%s203 + $0x958] sm:$0xff]
        %v563 = vld [vmem:[%s203 + $0x960] sm:$0xff]
        %v564 = vld [vmem:[%s203 + $0x968] sm:$0xff]
        %v565 = vld [vmem:[%s203 + $0x970] sm:$0xff]
        %v566 = vld [vmem:[%s203 + $0x978] sm:$0xff]
        %v567 = vld [vmem:[%s203 + $0x980] sm:$0xff]
        %v568 = vld [vmem:[%s203 + $0x988] sm:$0xff]
        %v569 = vld [vmem:[%s203 + $0x990] sm:$0xff]
        %v570 = vld [vmem:[%s203 + $0x998] sm:$0xff]
        %v571 = vld [vmem:[%s203 + $0x9a0] sm:$0xff]
        %v572 = vld [vmem:[%s203 + $0x9a8] sm:$0xff]
        %v573 = vld [vmem:[%s203 + $0x9b0] sm:$0xff]
        %v574 = vld [vmem:[%s203 + $0x9b8] sm:$0xff]
        %v575 = vld [vmem:[%s203 + $0x9c0] sm:$0xff]
        %v576 = vld [vmem:[%s203 + $0x9c8] sm:$0xff]
        %v577 = vld [vmem:[%s203 + $0x9d0] sm:$0xff]
        %v578 = vld [vmem:[%s203 + $0x9d8] sm:$0xff]
        %v579 = vld [vmem:[%s203 + $0x9e0] sm:$0xff]
        %v580 = vld [vmem:[%s203 + $0x9e8] sm:$0xff]
        %v581 = vld [vmem:[%s203 + $0x9f0] sm:$0xff]
        %v582 = vld [vmem:[%s203 + $0x9f8] sm:$0xff]
        %v583 = vld [vmem:[%s203 + $0xa00] sm:$0xff]
        %v584 = vld [vmem:[%s203 + $0xa08] sm:$0xff]
        %v585 = vld [vmem:[%s203 + $0xa10] sm:$0xff]
        %v586 = vld [vmem:[%s203 + $0xa18] sm:$0xff]
        %v587 = vld [vmem:[%s203 + $0xa20] sm:$0xff]
        %v588 = vld [vmem:[%s203 + $0xa28] sm:$0xff]
        %v589 = vld [vmem:[%s203 + $0xa30] sm:$0xff]
        %v590 = vld [vmem:[%s203 + $0xa38] sm:$0xff]
        %v591 = vld [vmem:[%s203 + $0xa40] sm:$0xff]
        %v592 = vld [vmem:[%s203 + $0xa48] sm:$0xff]
        %v593 = vld [vmem:[%s203 + $0xa50] sm:$0xff]
        %v594 = vld [vmem:[%s203 + $0xa58] sm:$0xff]
        %v595 = vld [vmem:[%s203 + $0xa60] sm:$0xff]
        %v596 = vld [vmem:[%s203 + $0xa68] sm:$0xff]
        %v597 = vld [vmem:[%s203 + $0xa70] sm:$0xff]
        %v598 = vld [vmem:[%s203 + $0xa78] sm:$0xff]
        %v599 = vld [vmem:[%s203 + $0xa80] sm:$0xff]
        %v600 = vld [vmem:[%s203 + $0xa88] sm:$0xff]
        %v601 = vld [vmem:[%s203 + $0xa90] sm:$0xff]
        %v602 = vld [vmem:[%s203 + $0xa98] sm:$0xff]
        %v603 = vld [vmem:[%s203 + $0xaa0] sm:$0xff]
        %v604 = vld [vmem:[%s203 + $0xaa8] sm:$0xff]
        %v605 = vld [vmem:[%s203 + $0xab0] sm:$0xff]
        %v606 = vld [vmem:[%s203 + $0xab8] sm:$0xff]
        %v607 = vld [vmem:[%s203 + $0xac0] sm:$0xff]
        %v608 = vld [vmem:[%s203 + $0xac8] sm:$0xff]
        %v609 = vld [vmem:[%s203 + $0xad0] sm:$0xff]
        %v610 = vld [vmem:[%s203 + $0xad8] sm:$0xff]
        %v611 = vld [vmem:[%s203 + $0xae0] sm:$0xff]
        %v612 = vld [vmem:[%s203 + $0xae8] sm:$0xff]
        %v613 = vld [vmem:[%s203 + $0xaf0] sm:$0xff]
        %v614 = vld [vmem:[%s203 + $0xaf8] sm:$0xff]
        %v615 = vld [vmem:[%s203 + $0xb00] sm:$0xff]
        %v616 = vld [vmem:[%s203 + $0xb08] sm:$0xff]
        %v617 = vld [vmem:[%s203 + $0xb10] sm:$0xff]
        %v618 = vld [vmem:[%s203 + $0xb18] sm:$0xff]
        %v619 = vld [vmem:[%s203 + $0xb20] sm:$0xff]
        %v620 = vld [vmem:[%s203 + $0xb28] sm:$0xff]
        %v621 = vld [vmem:[%s203 + $0xb30] sm:$0xff]
        %v622 = vld [vmem:[%s203 + $0xb38] sm:$0xff]
        %v623 = vld [vmem:[%s203 + $0xb40] sm:$0xff]
        %v624 = vld [vmem:[%s203 + $0xb48] sm:$0xff]
        %v625 = vld [vmem:[%s203 + $0xb50] sm:$0xff]
        %v626 = vld [vmem:[%s203 + $0xb58] sm:$0xff]
        %v627 = vld [vmem:[%s203 + $0xb60] sm:$0xff]
        %v628 = vld [vmem:[%s203 + $0xb68] sm:$0xff]
        %v629 = vld [vmem:[%s203 + $0xb70] sm:$0xff]
        %v630 = vld [vmem:[%s203 + $0xb78] sm:$0xff]
        %v631 = vld [vmem:[%s203 + $0xb80] sm:$0xff]
        %v632 = vld [vmem:[%s203 + $0xb88] sm:$0xff]
        %v633 = vld [vmem:[%s203 + $0xb90] sm:$0xff]
        %v634 = vld [vmem:[%s203 + $0xb98] sm:$0xff]
        %v635 = vld [vmem:[%s203 + $0xba0] sm:$0xff]
        %v636 = vld [vmem:[%s203 + $0xba8] sm:$0xff]
        %v637 = vld [vmem:[%s203 + $0xbb0] sm:$0xff]
        %v638 = vld [vmem:[%s203 + $0xbb8] sm:$0xff]
        %v639 = vld [vmem:[%s203 + $0xbc0] sm:$0xff]
        %v640 = vld [vmem:[%s203 + $0xbc8] sm:$0xff]
        %v641 = vld [vmem:[%s203 + $0xbd0] sm:$0xff]
        %v642 = vld [vmem:[%s203 + $0xbd8] sm:$0xff]
        %v643 = vld [vmem:[%s203 + $0xbe0] sm:$0xff]
        %v644 = vld [vmem:[%s203 + $0xbe8] sm:$0xff]
        %v645 = vld [vmem:[%s203 + $0xbf0] sm:$0xff]
        %v646 = vld [vmem:[%s203 + $0xbf8] sm:$0xff]
        %v647 = vld [vmem:[%s212] sm:$0xff]
        %v648 = vld [vmem:[%s212 + $0x8] sm:$0xff]
        %v649 = vld [vmem:[%s212 + $0x10] sm:$0xff]
        %v650 = vld [vmem:[%s212 + $0x18] sm:$0xff]
        %v651 = vld [vmem:[%s212 + $0x20] sm:$0xff]
        %v652 = vld [vmem:[%s212 + $0x28] sm:$0xff]
        %v653 = vld [vmem:[%s212 + $0x30] sm:$0xff]
        %v654 = vld [vmem:[%s212 + $0x38] sm:$0xff]
        %v655 = vld [vmem:[%s212 + $0x40] sm:$0xff]
        %v656 = vld [vmem:[%s212 + $0x48] sm:$0xff]
        %v657 = vld [vmem:[%s212 + $0x50] sm:$0xff]
        %v658 = vld [vmem:[%s212 + $0x58] sm:$0xff]
        %v659 = vld [vmem:[%s212 + $0x60] sm:$0xff]
        %v660 = vld [vmem:[%s212 + $0x68] sm:$0xff]
        %v661 = vld [vmem:[%s212 + $0x70] sm:$0xff]
        %v662 = vld [vmem:[%s212 + $0x78] sm:$0xff]
        %v663 = vld [vmem:[%s212 + $0x80] sm:$0xff]
        %v664 = vld [vmem:[%s212 + $0x88] sm:$0xff]
        %v665 = vld [vmem:[%s212 + $0x90] sm:$0xff]
        %v666 = vld [vmem:[%s212 + $0x98] sm:$0xff]
        %v667 = vld [vmem:[%s212 + $0xa0] sm:$0xff]
        %v668 = vld [vmem:[%s212 + $0xa8] sm:$0xff]
        %v669 = vld [vmem:[%s212 + $0xb0] sm:$0xff]
        %v670 = vld [vmem:[%s212 + $0xb8] sm:$0xff]
        %v671 = vld [vmem:[%s212 + $0xc0] sm:$0xff]
        %v672 = vld [vmem:[%s212 + $0xc8] sm:$0xff]
        %v673 = vld [vmem:[%s212 + $0xd0] sm:$0xff]
        %v674 = vld [vmem:[%s212 + $0xd8] sm:$0xff]
        %v675 = vld [vmem:[%s212 + $0xe0] sm:$0xff]
        %v676 = vld [vmem:[%s212 + $0xe8] sm:$0xff]
        %v677 = vld [vmem:[%s212 + $0xf0] sm:$0xff]
        %v678 = vld [vmem:[%s212 + $0xf8] sm:$0xff]
        %v679 = vld [vmem:[%s212 + $0x100] sm:$0xff]
        %v680 = vld [vmem:[%s212 + $0x108] sm:$0xff]
        %v681 = vld [vmem:[%s212 + $0x110] sm:$0xff]
        %v682 = vld [vmem:[%s212 + $0x118] sm:$0xff]
        %v683 = vld [vmem:[%s212 + $0x120] sm:$0xff]
        %v684 = vld [vmem:[%s212 + $0x128] sm:$0xff]
        %v685 = vld [vmem:[%s212 + $0x130] sm:$0xff]
        %v686 = vld [vmem:[%s212 + $0x138] sm:$0xff]
        %v687 = vld [vmem:[%s212 + $0x140] sm:$0xff]
        %v688 = vld [vmem:[%s212 + $0x148] sm:$0xff]
        %v689 = vld [vmem:[%s212 + $0x150] sm:$0xff]
        %v690 = vld [vmem:[%s212 + $0x158] sm:$0xff]
        %v691 = vld [vmem:[%s212 + $0x160] sm:$0xff]
        %v692 = vld [vmem:[%s212 + $0x168] sm:$0xff]
        %v693 = vld [vmem:[%s212 + $0x170] sm:$0xff]
        %v694 = vld [vmem:[%s212 + $0x178] sm:$0xff]
        %v695 = vld [vmem:[%s212 + $0x180] sm:$0xff]
        %v696 = vld [vmem:[%s212 + $0x188] sm:$0xff]
        %v697 = vld [vmem:[%s212 + $0x190] sm:$0xff]
        %v698 = vld [vmem:[%s212 + $0x198] sm:$0xff]
        %v699 = vld [vmem:[%s212 + $0x1a0] sm:$0xff]
        %v700 = vld [vmem:[%s212 + $0x1a8] sm:$0xff]
        %v701 = vld [vmem:[%s212 + $0x1b0] sm:$0xff]
        %v702 = vld [vmem:[%s212 + $0x1b8] sm:$0xff]
        %v703 = vld [vmem:[%s212 + $0x1c0] sm:$0xff]
        %v704 = vld [vmem:[%s212 + $0x1c8] sm:$0xff]
        %v705 = vld [vmem:[%s212 + $0x1d0] sm:$0xff]
        %v706 = vld [vmem:[%s212 + $0x1d8] sm:$0xff]
        %v707 = vld [vmem:[%s212 + $0x1e0] sm:$0xff]
        %v708 = vld [vmem:[%s212 + $0x1e8] sm:$0xff]
        %v709 = vld [vmem:[%s212 + $0x1f0] sm:$0xff]
        %v710 = vld [vmem:[%s212 + $0x1f8] sm:$0xff]
        %v711 = vld [vmem:[%s212 + $0x200] sm:$0xff]
        %v712 = vld [vmem:[%s212 + $0x208] sm:$0xff]
        %v713 = vld [vmem:[%s212 + $0x210] sm:$0xff]
        %v714 = vld [vmem:[%s212 + $0x218] sm:$0xff]
        %v715 = vld [vmem:[%s212 + $0x220] sm:$0xff]
        %v716 = vld [vmem:[%s212 + $0x228] sm:$0xff]
        %v717 = vld [vmem:[%s212 + $0x230] sm:$0xff]
        %v718 = vld [vmem:[%s212 + $0x238] sm:$0xff]
        %v719 = vld [vmem:[%s212 + $0x240] sm:$0xff]
        %v720 = vld [vmem:[%s212 + $0x248] sm:$0xff]
        %v721 = vld [vmem:[%s212 + $0x250] sm:$0xff]
        %v722 = vld [vmem:[%s212 + $0x258] sm:$0xff]
        %v723 = vld [vmem:[%s212 + $0x260] sm:$0xff]
        %v724 = vld [vmem:[%s212 + $0x268] sm:$0xff]
        %v725 = vld [vmem:[%s212 + $0x270] sm:$0xff]
        %v726 = vld [vmem:[%s212 + $0x278] sm:$0xff]
        %v727 = vld [vmem:[%s212 + $0x280] sm:$0xff]
        %v728 = vld [vmem:[%s212 + $0x288] sm:$0xff]
        %v729 = vld [vmem:[%s212 + $0x290] sm:$0xff]
        %v730 = vld [vmem:[%s212 + $0x298] sm:$0xff]
        %v731 = vld [vmem:[%s212 + $0x2a0] sm:$0xff]
        %v732 = vld [vmem:[%s212 + $0x2a8] sm:$0xff]
        %v733 = vld [vmem:[%s212 + $0x2b0] sm:$0xff]
        %v734 = vld [vmem:[%s212 + $0x2b8] sm:$0xff]
        %v735 = vld [vmem:[%s212 + $0x2c0] sm:$0xff]
        %v736 = vld [vmem:[%s212 + $0x2c8] sm:$0xff]
        %v737 = vld [vmem:[%s212 + $0x2d0] sm:$0xff]
        %v738 = vld [vmem:[%s212 + $0x2d8] sm:$0xff]
        %v739 = vld [vmem:[%s212 + $0x2e0] sm:$0xff]
        %v740 = vld [vmem:[%s212 + $0x2e8] sm:$0xff]
        %v741 = vld [vmem:[%s212 + $0x2f0] sm:$0xff]
        %v742 = vld [vmem:[%s212 + $0x2f8] sm:$0xff]
        %v743 = vld [vmem:[%s212 + $0x300] sm:$0xff]
        %v744 = vld [vmem:[%s212 + $0x308] sm:$0xff]
        %v745 = vld [vmem:[%s212 + $0x310] sm:$0xff]
        %v746 = vld [vmem:[%s212 + $0x318] sm:$0xff]
        %v747 = vld [vmem:[%s212 + $0x320] sm:$0xff]
        %v748 = vld [vmem:[%s212 + $0x328] sm:$0xff]
        %v749 = vld [vmem:[%s212 + $0x330] sm:$0xff]
        %v750 = vld [vmem:[%s212 + $0x338] sm:$0xff]
        %v751 = vld [vmem:[%s212 + $0x340] sm:$0xff]
        %v752 = vld [vmem:[%s212 + $0x348] sm:$0xff]
        %v753 = vld [vmem:[%s212 + $0x350] sm:$0xff]
        %v754 = vld [vmem:[%s212 + $0x358] sm:$0xff]
        %v755 = vld [vmem:[%s212 + $0x360] sm:$0xff]
        %v756 = vld [vmem:[%s212 + $0x368] sm:$0xff]
        %v757 = vld [vmem:[%s212 + $0x370] sm:$0xff]
        %v758 = vld [vmem:[%s212 + $0x378] sm:$0xff]
        %v759 = vld [vmem:[%s212 + $0x380] sm:$0xff]
        %v760 = vld [vmem:[%s212 + $0x388] sm:$0xff]
        %v761 = vld [vmem:[%s212 + $0x390] sm:$0xff]
        %v762 = vld [vmem:[%s212 + $0x398] sm:$0xff]
        %v763 = vld [vmem:[%s212 + $0x3a0] sm:$0xff]
        %v764 = vld [vmem:[%s212 + $0x3a8] sm:$0xff]
        %v765 = vld [vmem:[%s212 + $0x3b0] sm:$0xff]
        %v766 = vld [vmem:[%s212 + $0x3b8] sm:$0xff]
        %v767 = vld [vmem:[%s212 + $0x3c0] sm:$0xff]
        %v768 = vld [vmem:[%s212 + $0x3c8] sm:$0xff]
        %v769 = vld [vmem:[%s212 + $0x3d0] sm:$0xff]
        %v770 = vld [vmem:[%s212 + $0x3d8] sm:$0xff]
        %v771 = vld [vmem:[%s212 + $0x3e0] sm:$0xff]
        %v772 = vld [vmem:[%s212 + $0x3e8] sm:$0xff]
        %v773 = vld [vmem:[%s212 + $0x3f0] sm:$0xff]
        %v774 = vld [vmem:[%s212 + $0x3f8] sm:$0xff]
        %v775 = vld [vmem:[%s212 + $0x400] sm:$0xff]
        %v776 = vld [vmem:[%s212 + $0x408] sm:$0xff]
        %v777 = vld [vmem:[%s212 + $0x410] sm:$0xff]
        %v778 = vld [vmem:[%s212 + $0x418] sm:$0xff]
        %v779 = vld [vmem:[%s212 + $0x420] sm:$0xff]
        %v780 = vld [vmem:[%s212 + $0x428] sm:$0xff]
        %v781 = vld [vmem:[%s212 + $0x430] sm:$0xff]
        %v782 = vld [vmem:[%s212 + $0x438] sm:$0xff]
        %v783 = vld [vmem:[%s212 + $0x440] sm:$0xff]
        %v784 = vld [vmem:[%s212 + $0x448] sm:$0xff]
        %v785 = vld [vmem:[%s212 + $0x450] sm:$0xff]
        %v786 = vld [vmem:[%s212 + $0x458] sm:$0xff]
        %v787 = vld [vmem:[%s212 + $0x460] sm:$0xff]
        %v788 = vld [vmem:[%s212 + $0x468] sm:$0xff]
        %v789 = vld [vmem:[%s212 + $0x470] sm:$0xff]
        %v790 = vld [vmem:[%s212 + $0x478] sm:$0xff]
        %v791 = vld [vmem:[%s212 + $0x480] sm:$0xff]
        %v792 = vld [vmem:[%s212 + $0x488] sm:$0xff]
        %v793 = vld [vmem:[%s212 + $0x490] sm:$0xff]
        %v794 = vld [vmem:[%s212 + $0x498] sm:$0xff]
        %v795 = vld [vmem:[%s212 + $0x4a0] sm:$0xff]
        %v796 = vld [vmem:[%s212 + $0x4a8] sm:$0xff]
        %v797 = vld [vmem:[%s212 + $0x4b0] sm:$0xff]
        %v798 = vld [vmem:[%s212 + $0x4b8] sm:$0xff]
        %v799 = vld [vmem:[%s212 + $0x4c0] sm:$0xff]
        %v800 = vld [vmem:[%s212 + $0x4c8] sm:$0xff]
        %v801 = vld [vmem:[%s212 + $0x4d0] sm:$0xff]
        %v802 = vld [vmem:[%s212 + $0x4d8] sm:$0xff]
        %v803 = vld [vmem:[%s212 + $0x4e0] sm:$0xff]
        %v804 = vld [vmem:[%s212 + $0x4e8] sm:$0xff]
        %v805 = vld [vmem:[%s212 + $0x4f0] sm:$0xff]
        %v806 = vld [vmem:[%s212 + $0x4f8] sm:$0xff]
        %v807 = vld [vmem:[%s212 + $0x500] sm:$0xff]
        %v808 = vld [vmem:[%s212 + $0x508] sm:$0xff]
        %v809 = vld [vmem:[%s212 + $0x510] sm:$0xff]
        %v810 = vld [vmem:[%s212 + $0x518] sm:$0xff]
        %v811 = vld [vmem:[%s212 + $0x520] sm:$0xff]
        %v812 = vld [vmem:[%s212 + $0x528] sm:$0xff]
        %v813 = vld [vmem:[%s212 + $0x530] sm:$0xff]
        %v814 = vld [vmem:[%s212 + $0x538] sm:$0xff]
        %v815 = vld [vmem:[%s212 + $0x540] sm:$0xff]
        %v816 = vld [vmem:[%s212 + $0x548] sm:$0xff]
        %v817 = vld [vmem:[%s212 + $0x550] sm:$0xff]
        %v818 = vld [vmem:[%s212 + $0x558] sm:$0xff]
        %v819 = vld [vmem:[%s212 + $0x560] sm:$0xff]
        %v820 = vld [vmem:[%s212 + $0x568] sm:$0xff]
        %v821 = vld [vmem:[%s212 + $0x570] sm:$0xff]
        %v822 = vld [vmem:[%s212 + $0x578] sm:$0xff]
        %v823 = vld [vmem:[%s212 + $0x580] sm:$0xff]
        %v824 = vld [vmem:[%s212 + $0x588] sm:$0xff]
        %v825 = vld [vmem:[%s212 + $0x590] sm:$0xff]
        %v826 = vld [vmem:[%s212 + $0x598] sm:$0xff]
        %v827 = vld [vmem:[%s212 + $0x5a0] sm:$0xff]
        %v828 = vld [vmem:[%s212 + $0x5a8] sm:$0xff]
        %v829 = vld [vmem:[%s212 + $0x5b0] sm:$0xff]
        %v830 = vld [vmem:[%s212 + $0x5b8] sm:$0xff]
        %v831 = vld [vmem:[%s212 + $0x5c0] sm:$0xff]
        %v832 = vld [vmem:[%s212 + $0x5c8] sm:$0xff]
        %v833 = vld [vmem:[%s212 + $0x5d0] sm:$0xff]
        %v834 = vld [vmem:[%s212 + $0x5d8] sm:$0xff]
        %v835 = vld [vmem:[%s212 + $0x5e0] sm:$0xff]
        %v836 = vld [vmem:[%s212 + $0x5e8] sm:$0xff]
        %v837 = vld [vmem:[%s212 + $0x5f0] sm:$0xff]
        %v838 = vld [vmem:[%s212 + $0x5f8] sm:$0xff]
        %v839 = vld [vmem:[%s212 + $0x600] sm:$0xff]
        %v840 = vld [vmem:[%s212 + $0x608] sm:$0xff]
        %v841 = vld [vmem:[%s212 + $0x610] sm:$0xff]
        %v842 = vld [vmem:[%s212 + $0x618] sm:$0xff]
        %v843 = vld [vmem:[%s212 + $0x620] sm:$0xff]
        %v844 = vld [vmem:[%s212 + $0x628] sm:$0xff]
        %v845 = vld [vmem:[%s212 + $0x630] sm:$0xff]
        %v846 = vld [vmem:[%s212 + $0x638] sm:$0xff]
        %v847 = vld [vmem:[%s212 + $0x640] sm:$0xff]
        %v848 = vld [vmem:[%s212 + $0x648] sm:$0xff]
        %v849 = vld [vmem:[%s212 + $0x650] sm:$0xff]
        %v850 = vld [vmem:[%s212 + $0x658] sm:$0xff]
        %v851 = vld [vmem:[%s212 + $0x660] sm:$0xff]
        %v852 = vld [vmem:[%s212 + $0x668] sm:$0xff]
        %v853 = vld [vmem:[%s212 + $0x670] sm:$0xff]
        %v854 = vld [vmem:[%s212 + $0x678] sm:$0xff]
        %v855 = vld [vmem:[%s212 + $0x680] sm:$0xff]
        %v856 = vld [vmem:[%s212 + $0x688] sm:$0xff]
        %v857 = vld [vmem:[%s212 + $0x690] sm:$0xff]
        %v858 = vld [vmem:[%s212 + $0x698] sm:$0xff]
        %v859 = vld [vmem:[%s212 + $0x6a0] sm:$0xff]
        %v860 = vld [vmem:[%s212 + $0x6a8] sm:$0xff]
        %v861 = vld [vmem:[%s212 + $0x6b0] sm:$0xff]
        %v862 = vld [vmem:[%s212 + $0x6b8] sm:$0xff]
        %v863 = vld [vmem:[%s212 + $0x6c0] sm:$0xff]
        %v864 = vld [vmem:[%s212 + $0x6c8] sm:$0xff]
        %v865 = vld [vmem:[%s212 + $0x6d0] sm:$0xff]
        %v866 = vld [vmem:[%s212 + $0x6d8] sm:$0xff]
        %v867 = vld [vmem:[%s212 + $0x6e0] sm:$0xff]
        %v868 = vld [vmem:[%s212 + $0x6e8] sm:$0xff]
        %v869 = vld [vmem:[%s212 + $0x6f0] sm:$0xff]
        %v870 = vld [vmem:[%s212 + $0x6f8] sm:$0xff]
        %v871 = vld [vmem:[%s212 + $0x700] sm:$0xff]
        %v872 = vld [vmem:[%s212 + $0x708] sm:$0xff]
        %v873 = vld [vmem:[%s212 + $0x710] sm:$0xff]
        %v874 = vld [vmem:[%s212 + $0x718] sm:$0xff]
        %v875 = vld [vmem:[%s212 + $0x720] sm:$0xff]
        %v876 = vld [vmem:[%s212 + $0x728] sm:$0xff]
        %v877 = vld [vmem:[%s212 + $0x730] sm:$0xff]
        %v878 = vld [vmem:[%s212 + $0x738] sm:$0xff]
        %v879 = vld [vmem:[%s212 + $0x740] sm:$0xff]
        %v880 = vld [vmem:[%s212 + $0x748] sm:$0xff]
        %v881 = vld [vmem:[%s212 + $0x750] sm:$0xff]
        %v882 = vld [vmem:[%s212 + $0x758] sm:$0xff]
        %v883 = vld [vmem:[%s212 + $0x760] sm:$0xff]
        %v884 = vld [vmem:[%s212 + $0x768] sm:$0xff]
        %v885 = vld [vmem:[%s212 + $0x770] sm:$0xff]
        %v886 = vld [vmem:[%s212 + $0x778] sm:$0xff]
        %v887 = vld [vmem:[%s212 + $0x780] sm:$0xff]
        %v888 = vld [vmem:[%s212 + $0x788] sm:$0xff]
        %v889 = vld [vmem:[%s212 + $0x790] sm:$0xff]
        %v890 = vld [vmem:[%s212 + $0x798] sm:$0xff]
        %v891 = vld [vmem:[%s212 + $0x7a0] sm:$0xff]
        %v892 = vld [vmem:[%s212 + $0x7a8] sm:$0xff]
        %v893 = vld [vmem:[%s212 + $0x7b0] sm:$0xff]
        %v894 = vld [vmem:[%s212 + $0x7b8] sm:$0xff]
        %v895 = vld [vmem:[%s212 + $0x7c0] sm:$0xff]
        %v896 = vld [vmem:[%s212 + $0x7c8] sm:$0xff]
        %v897 = vld [vmem:[%s212 + $0x7d0] sm:$0xff]
        %v898 = vld [vmem:[%s212 + $0x7d8] sm:$0xff]
        %v899 = vld [vmem:[%s212 + $0x7e0] sm:$0xff]
        %v900 = vld [vmem:[%s212 + $0x7e8] sm:$0xff]
        %v901 = vld [vmem:[%s212 + $0x7f0] sm:$0xff]
        %v902 = vld [vmem:[%s212 + $0x7f8] sm:$0xff]
        %v903 = vld [vmem:[%s212 + $0x800] sm:$0xff]
        %v904 = vld [vmem:[%s212 + $0x808] sm:$0xff]
        %v905 = vld [vmem:[%s212 + $0x810] sm:$0xff]
        %v906 = vld [vmem:[%s212 + $0x818] sm:$0xff]
        %v907 = vld [vmem:[%s212 + $0x820] sm:$0xff]
        %v908 = vld [vmem:[%s212 + $0x828] sm:$0xff]
        %v909 = vld [vmem:[%s212 + $0x830] sm:$0xff]
        %v910 = vld [vmem:[%s212 + $0x838] sm:$0xff]
        %v911 = vld [vmem:[%s212 + $0x840] sm:$0xff]
        %v912 = vld [vmem:[%s212 + $0x848] sm:$0xff]
        %v913 = vld [vmem:[%s212 + $0x850] sm:$0xff]
        %v914 = vld [vmem:[%s212 + $0x858] sm:$0xff]
        %v915 = vld [vmem:[%s212 + $0x860] sm:$0xff]
        %v916 = vld [vmem:[%s212 + $0x868] sm:$0xff]
        %v917 = vld [vmem:[%s212 + $0x870] sm:$0xff]
        %v918 = vld [vmem:[%s212 + $0x878] sm:$0xff]
        %v919 = vld [vmem:[%s212 + $0x880] sm:$0xff]
        %v920 = vld [vmem:[%s212 + $0x888] sm:$0xff]
        %v921 = vld [vmem:[%s212 + $0x890] sm:$0xff]
        %v922 = vld [vmem:[%s212 + $0x898] sm:$0xff]
        %v923 = vld [vmem:[%s212 + $0x8a0] sm:$0xff]
        %v924 = vld [vmem:[%s212 + $0x8a8] sm:$0xff]
        %v925 = vld [vmem:[%s212 + $0x8b0] sm:$0xff]
        %v926 = vld [vmem:[%s212 + $0x8b8] sm:$0xff]
        %v927 = vld [vmem:[%s212 + $0x8c0] sm:$0xff]
        %v928 = vld [vmem:[%s212 + $0x8c8] sm:$0xff]
        %v929 = vld [vmem:[%s212 + $0x8d0] sm:$0xff]
        %v930 = vld [vmem:[%s212 + $0x8d8] sm:$0xff]
        %v931 = vld [vmem:[%s212 + $0x8e0] sm:$0xff]
        %v932 = vld [vmem:[%s212 + $0x8e8] sm:$0xff]
        %v933 = vld [vmem:[%s212 + $0x8f0] sm:$0xff]
        %v934 = vld [vmem:[%s212 + $0x8f8] sm:$0xff]
        %v935 = vld [vmem:[%s212 + $0x900] sm:$0xff]
        %v936 = vld [vmem:[%s212 + $0x908] sm:$0xff]
        %v937 = vld [vmem:[%s212 + $0x910] sm:$0xff]
        %v938 = vld [vmem:[%s212 + $0x918] sm:$0xff]
        %v939 = vld [vmem:[%s212 + $0x920] sm:$0xff]
        %v940 = vld [vmem:[%s212 + $0x928] sm:$0xff]
        %v941 = vld [vmem:[%s212 + $0x930] sm:$0xff]
        %v942 = vld [vmem:[%s212 + $0x938] sm:$0xff]
        %v943 = vld [vmem:[%s212 + $0x940] sm:$0xff]
        %v944 = vld [vmem:[%s212 + $0x948] sm:$0xff]
        %v945 = vld [vmem:[%s212 + $0x950] sm:$0xff]
        %v946 = vld [vmem:[%s212 + $0x958] sm:$0xff]
        %v947 = vld [vmem:[%s212 + $0x960] sm:$0xff]
        %v948 = vld [vmem:[%s212 + $0x968] sm:$0xff]
        %v949 = vld [vmem:[%s212 + $0x970] sm:$0xff]
        %v950 = vld [vmem:[%s212 + $0x978] sm:$0xff]
        %v951 = vld [vmem:[%s212 + $0x980] sm:$0xff]
        %v952 = vld [vmem:[%s212 + $0x988] sm:$0xff]
        %v953 = vld [vmem:[%s212 + $0x990] sm:$0xff]
        %v954 = vld [vmem:[%s212 + $0x998] sm:$0xff]
        %v955 = vld [vmem:[%s212 + $0x9a0] sm:$0xff]
        %v956 = vld [vmem:[%s212 + $0x9a8] sm:$0xff]
        %v957 = vld [vmem:[%s212 + $0x9b0] sm:$0xff]
        %v958 = vld [vmem:[%s212 + $0x9b8] sm:$0xff]
        %v959 = vld [vmem:[%s212 + $0x9c0] sm:$0xff]
        %v960 = vld [vmem:[%s212 + $0x9c8] sm:$0xff]
        %v961 = vld [vmem:[%s212 + $0x9d0] sm:$0xff]
        %v962 = vld [vmem:[%s212 + $0x9d8] sm:$0xff]
        %v963 = vld [vmem:[%s212 + $0x9e0] sm:$0xff]
        %v964 = vld [vmem:[%s212 + $0x9e8] sm:$0xff]
        %v965 = vld [vmem:[%s212 + $0x9f0] sm:$0xff]
        %v966 = vld [vmem:[%s212 + $0x9f8] sm:$0xff]
        %v967 = vld [vmem:[%s212 + $0xa00] sm:$0xff]
        %v968 = vld [vmem:[%s212 + $0xa08] sm:$0xff]
        %v969 = vld [vmem:[%s212 + $0xa10] sm:$0xff]
        %v970 = vld [vmem:[%s212 + $0xa18] sm:$0xff]
        %v971 = vld [vmem:[%s212 + $0xa20] sm:$0xff]
        %v972 = vld [vmem:[%s212 + $0xa28] sm:$0xff]
        %v973 = vld [vmem:[%s212 + $0xa30] sm:$0xff]
        %v974 = vld [vmem:[%s212 + $0xa38] sm:$0xff]
        %v975 = vld [vmem:[%s212 + $0xa40] sm:$0xff]
        %v976 = vld [vmem:[%s212 + $0xa48] sm:$0xff]
        %v977 = vld [vmem:[%s212 + $0xa50] sm:$0xff]
        %v978 = vld [vmem:[%s212 + $0xa58] sm:$0xff]
        %v979 = vld [vmem:[%s212 + $0xa60] sm:$0xff]
        %v980 = vld [vmem:[%s212 + $0xa68] sm:$0xff]
        %v981 = vld [vmem:[%s212 + $0xa70] sm:$0xff]
        %v982 = vld [vmem:[%s212 + $0xa78] sm:$0xff]
        %v983 = vld [vmem:[%s212 + $0xa80] sm:$0xff]
        %v984 = vld [vmem:[%s212 + $0xa88] sm:$0xff]
        %v985 = vld [vmem:[%s212 + $0xa90] sm:$0xff]
        %v986 = vld [vmem:[%s212 + $0xa98] sm:$0xff]
        %v987 = vld [vmem:[%s212 + $0xaa0] sm:$0xff]
        %v988 = vld [vmem:[%s212 + $0xaa8] sm:$0xff]
        %v989 = vld [vmem:[%s212 + $0xab0] sm:$0xff]
        %v990 = vld [vmem:[%s212 + $0xab8] sm:$0xff]
        %v991 = vld [vmem:[%s212 + $0xac0] sm:$0xff]
        %v992 = vld [vmem:[%s212 + $0xac8] sm:$0xff]
        %v993 = vld [vmem:[%s212 + $0xad0] sm:$0xff]
        %v994 = vld [vmem:[%s212 + $0xad8] sm:$0xff]
        %v995 = vld [vmem:[%s212 + $0xae0] sm:$0xff]
        %v996 = vld [vmem:[%s212 + $0xae8] sm:$0xff]
        %v997 = vld [vmem:[%s212 + $0xaf0] sm:$0xff]
        %v998 = vld [vmem:[%s212 + $0xaf8] sm:$0xff]
        %v999 = vld [vmem:[%s212 + $0xb00] sm:$0xff]
        %v1000 = vld [vmem:[%s212 + $0xb08] sm:$0xff]
        %v1001 = vld [vmem:[%s212 + $0xb10] sm:$0xff]
        %v1002 = vld [vmem:[%s212 + $0xb18] sm:$0xff]
        %v1003 = vld [vmem:[%s212 + $0xb20] sm:$0xff]
        %v1004 = vld [vmem:[%s212 + $0xb28] sm:$0xff]
        %v1005 = vld [vmem:[%s212 + $0xb30] sm:$0xff]
        %v1006 = vld [vmem:[%s212 + $0xb38] sm:$0xff]
        %v1007 = vld [vmem:[%s212 + $0xb40] sm:$0xff]
        %v1008 = vld [vmem:[%s212 + $0xb48] sm:$0xff]
        %v1009 = vld [vmem:[%s212 + $0xb50] sm:$0xff]
        %v1010 = vld [vmem:[%s212 + $0xb58] sm:$0xff]
        %v1011 = vld [vmem:[%s212 + $0xb60] sm:$0xff]
        %v1012 = vld [vmem:[%s212 + $0xb68] sm:$0xff]
        %v1013 = vld [vmem:[%s212 + $0xb70] sm:$0xff]
        %v1014 = vld [vmem:[%s212 + $0xb78] sm:$0xff]
        %v1015 = vld [vmem:[%s212 + $0xb80] sm:$0xff]
        %v1016 = vld [vmem:[%s212 + $0xb88] sm:$0xff]
        %v1017 = vld [vmem:[%s212 + $0xb90] sm:$0xff]
        %v1018 = vld [vmem:[%s212 + $0xb98] sm:$0xff]
        %v1019 = vld [vmem:[%s212 + $0xba0] sm:$0xff]
        %v1020 = vld [vmem:[%s212 + $0xba8] sm:$0xff]
        %v1021 = vld [vmem:[%s212 + $0xbb0] sm:$0xff]
        %v1022 = vld [vmem:[%s212 + $0xbb8] sm:$0xff]
        %v1023 = vld [vmem:[%s212 + $0xbc0] sm:$0xff]
        %v1024 = vld [vmem:[%s212 + $0xbc8] sm:$0xff]
        %v1025 = vld [vmem:[%s212 + $0xbd0] sm:$0xff]
        %v1026 = vld [vmem:[%s212 + $0xbd8] sm:$0xff]
        %v1027 = vld [vmem:[%s212 + $0xbe0] sm:$0xff]
        %v1028 = vld [vmem:[%s212 + $0xbe8] sm:$0xff]
        %v1029 = vld [vmem:[%s212 + $0xbf0] sm:$0xff]
        %v1030 = vld [vmem:[%s212 + $0xbf8] sm:$0xff]
        %v1031 = vmul.f32 %v263, %v647
        %v1032 = vmul.f32 %v264, %v648
        %v1033 = vmul.f32 %v265, %v649
        %v1034 = vmul.f32 %v266, %v650
        %v1035 = vmul.f32 %v267, %v651
        %v1036 = vmul.f32 %v268, %v652
        %v1037 = vmul.f32 %v269, %v653
        %v1038 = vmul.f32 %v270, %v654
        %v1039 = vmul.f32 %v271, %v655
        %v1040 = vmul.f32 %v272, %v656
        %v1041 = vmul.f32 %v273, %v657
        %v1042 = vmul.f32 %v274, %v658
        %v1043 = vmul.f32 %v275, %v659
        %v1044 = vmul.f32 %v276, %v660
        %v1045 = vmul.f32 %v277, %v661
        %v1046 = vmul.f32 %v278, %v662
        %v1047 = vmul.f32 %v279, %v663
        %v1048 = vmul.f32 %v280, %v664
        %v1049 = vmul.f32 %v281, %v665
        %v1050 = vmul.f32 %v282, %v666
        %v1051 = vmul.f32 %v283, %v667
        %v1052 = vmul.f32 %v284, %v668
        %v1053 = vmul.f32 %v285, %v669
        %v1054 = vmul.f32 %v286, %v670
        %v1055 = vmul.f32 %v287, %v671
        %v1056 = vmul.f32 %v288, %v672
        %v1057 = vmul.f32 %v289, %v673
        %v1058 = vmul.f32 %v290, %v674
        %v1059 = vmul.f32 %v291, %v675
        %v1060 = vmul.f32 %v292, %v676
        %v1061 = vmul.f32 %v293, %v677
        %v1062 = vmul.f32 %v294, %v678
        %v1063 = vmul.f32 %v295, %v679
        %v1064 = vmul.f32 %v296, %v680
        %v1065 = vmul.f32 %v297, %v681
        %v1066 = vmul.f32 %v298, %v682
        %v1067 = vmul.f32 %v299, %v683
        %v1068 = vmul.f32 %v300, %v684
        %v1069 = vmul.f32 %v301, %v685
        %v1070 = vmul.f32 %v302, %v686
        %v1071 = vmul.f32 %v303, %v687
        %v1072 = vmul.f32 %v304, %v688
        %v1073 = vmul.f32 %v305, %v689
        %v1074 = vmul.f32 %v306, %v690
        %v1075 = vmul.f32 %v307, %v691
        %v1076 = vmul.f32 %v308, %v692
        %v1077 = vmul.f32 %v309, %v693
        %v1078 = vmul.f32 %v310, %v694
        %v1079 = vmul.f32 %v311, %v695
        %v1080 = vmul.f32 %v312, %v696
        %v1081 = vmul.f32 %v313, %v697
        %v1082 = vmul.f32 %v314, %v698
        %v1083 = vmul.f32 %v315, %v699
        %v1084 = vmul.f32 %v316, %v700
        %v1085 = vmul.f32 %v317, %v701
        %v1086 = vmul.f32 %v318, %v702
        %v1087 = vmul.f32 %v319, %v703
        %v1088 = vmul.f32 %v320, %v704
        %v1089 = vmul.f32 %v321, %v705
        %v1090 = vmul.f32 %v322, %v706
        %v1091 = vmul.f32 %v323, %v707
        %v1092 = vmul.f32 %v324, %v708
        %v1093 = vmul.f32 %v325, %v709
        %v1094 = vmul.f32 %v326, %v710
        %v1095 = vmul.f32 %v327, %v711
        %v1096 = vmul.f32 %v328, %v712
        %v1097 = vmul.f32 %v329, %v713
        %v1098 = vmul.f32 %v330, %v714
        %v1099 = vmul.f32 %v331, %v715
        %v1100 = vmul.f32 %v332, %v716
        %v1101 = vmul.f32 %v333, %v717
        %v1102 = vmul.f32 %v334, %v718
        %v1103 = vmul.f32 %v335, %v719
        %v1104 = vmul.f32 %v336, %v720
        %v1105 = vmul.f32 %v337, %v721
        %v1106 = vmul.f32 %v338, %v722
        %v1107 = vmul.f32 %v339, %v723
        %v1108 = vmul.f32 %v340, %v724
        %v1109 = vmul.f32 %v341, %v725
        %v1110 = vmul.f32 %v342, %v726
        %v1111 = vmul.f32 %v343, %v727
        %v1112 = vmul.f32 %v344, %v728
        %v1113 = vmul.f32 %v345, %v729
        %v1114 = vmul.f32 %v346, %v730
        %v1115 = vmul.f32 %v347, %v731
        %v1116 = vmul.f32 %v348, %v732
        %v1117 = vmul.f32 %v349, %v733
        %v1118 = vmul.f32 %v350, %v734
        %v1119 = vmul.f32 %v351, %v735
        %v1120 = vmul.f32 %v352, %v736
        %v1121 = vmul.f32 %v353, %v737
        %v1122 = vmul.f32 %v354, %v738
        %v1123 = vmul.f32 %v355, %v739
        %v1124 = vmul.f32 %v356, %v740
        %v1125 = vmul.f32 %v357, %v741
        %v1126 = vmul.f32 %v358, %v742
        %v1127 = vmul.f32 %v359, %v743
        %v1128 = vmul.f32 %v360, %v744
        %v1129 = vmul.f32 %v361, %v745
        %v1130 = vmul.f32 %v362, %v746
        %v1131 = vmul.f32 %v363, %v747
        %v1132 = vmul.f32 %v364, %v748
        %v1133 = vmul.f32 %v365, %v749
        %v1134 = vmul.f32 %v366, %v750
        %v1135 = vmul.f32 %v367, %v751
        %v1136 = vmul.f32 %v368, %v752
        %v1137 = vmul.f32 %v369, %v753
        %v1138 = vmul.f32 %v370, %v754
        %v1139 = vmul.f32 %v371, %v755
        %v1140 = vmul.f32 %v372, %v756
        %v1141 = vmul.f32 %v373, %v757
        %v1142 = vmul.f32 %v374, %v758
        %v1143 = vmul.f32 %v375, %v759
        %v1144 = vmul.f32 %v376, %v760
        %v1145 = vmul.f32 %v377, %v761
        %v1146 = vmul.f32 %v378, %v762
        %v1147 = vmul.f32 %v379, %v763
        %v1148 = vmul.f32 %v380, %v764
        %v1149 = vmul.f32 %v381, %v765
        %v1150 = vmul.f32 %v382, %v766
        %v1151 = vmul.f32 %v383, %v767
        %v1152 = vmul.f32 %v384, %v768
        %v1153 = vmul.f32 %v385, %v769
        %v1154 = vmul.f32 %v386, %v770
        %v1155 = vmul.f32 %v387, %v771
        %v1156 = vmul.f32 %v388, %v772
        %v1157 = vmul.f32 %v389, %v773
        %v1158 = vmul.f32 %v390, %v774
        %v1159 = vmul.f32 %v391, %v775
        %v1160 = vmul.f32 %v392, %v776
        %v1161 = vmul.f32 %v393, %v777
        %v1162 = vmul.f32 %v394, %v778
        %v1163 = vmul.f32 %v395, %v779
        %v1164 = vmul.f32 %v396, %v780
        %v1165 = vmul.f32 %v397, %v781
        %v1166 = vmul.f32 %v398, %v782
        %v1167 = vmul.f32 %v399, %v783
        %v1168 = vmul.f32 %v400, %v784
        %v1169 = vmul.f32 %v401, %v785
        %v1170 = vmul.f32 %v402, %v786
        %v1171 = vmul.f32 %v403, %v787
        %v1172 = vmul.f32 %v404, %v788
        %v1173 = vmul.f32 %v405, %v789
        %v1174 = vmul.f32 %v406, %v790
        %v1175 = vmul.f32 %v407, %v791
        %v1176 = vmul.f32 %v408, %v792
        %v1177 = vmul.f32 %v409, %v793
        %v1178 = vmul.f32 %v410, %v794
        %v1179 = vmul.f32 %v411, %v795
        %v1180 = vmul.f32 %v412, %v796
        %v1181 = vmul.f32 %v413, %v797
        %v1182 = vmul.f32 %v414, %v798
        %v1183 = vmul.f32 %v415, %v799
        %v1184 = vmul.f32 %v416, %v800
        %v1185 = vmul.f32 %v417, %v801
        %v1186 = vmul.f32 %v418, %v802
        %v1187 = vmul.f32 %v419, %v803
        %v1188 = vmul.f32 %v420, %v804
        %v1189 = vmul.f32 %v421, %v805
        %v1190 = vmul.f32 %v422, %v806
        %v1191 = vmul.f32 %v423, %v807
        %v1192 = vmul.f32 %v424, %v808
        %v1193 = vmul.f32 %v425, %v809
        %v1194 = vmul.f32 %v426, %v810
        %v1195 = vmul.f32 %v427, %v811
        %v1196 = vmul.f32 %v428, %v812
        %v1197 = vmul.f32 %v429, %v813
        %v1198 = vmul.f32 %v430, %v814
        %v1199 = vmul.f32 %v431, %v815
        %v1200 = vmul.f32 %v432, %v816
        %v1201 = vmul.f32 %v433, %v817
        %v1202 = vmul.f32 %v434, %v818
        %v1203 = vmul.f32 %v435, %v819
        %v1204 = vmul.f32 %v436, %v820
        %v1205 = vmul.f32 %v437, %v821
        %v1206 = vmul.f32 %v438, %v822
        %v1207 = vmul.f32 %v439, %v823
        %v1208 = vmul.f32 %v440, %v824
        %v1209 = vmul.f32 %v441, %v825
        %v1210 = vmul.f32 %v442, %v826
        %v1211 = vmul.f32 %v443, %v827
        %v1212 = vmul.f32 %v444, %v828
        %v1213 = vmul.f32 %v445, %v829
        %v1214 = vmul.f32 %v446, %v830
        %v1215 = vmul.f32 %v447, %v831
        %v1216 = vmul.f32 %v448, %v832
        %v1217 = vmul.f32 %v449, %v833
        %v1218 = vmul.f32 %v450, %v834
        %v1219 = vmul.f32 %v451, %v835
        %v1220 = vmul.f32 %v452, %v836
        %v1221 = vmul.f32 %v453, %v837
        %v1222 = vmul.f32 %v454, %v838
        %v1223 = vmul.f32 %v455, %v839
        %v1224 = vmul.f32 %v456, %v840
        %v1225 = vmul.f32 %v457, %v841
        %v1226 = vmul.f32 %v458, %v842
        %v1227 = vmul.f32 %v459, %v843
        %v1228 = vmul.f32 %v460, %v844
        %v1229 = vmul.f32 %v461, %v845
        %v1230 = vmul.f32 %v462, %v846
        %v1231 = vmul.f32 %v463, %v847
        %v1232 = vmul.f32 %v464, %v848
        %v1233 = vmul.f32 %v465, %v849
        %v1234 = vmul.f32 %v466, %v850
        %v1235 = vmul.f32 %v467, %v851
        %v1236 = vmul.f32 %v468, %v852
        %v1237 = vmul.f32 %v469, %v853
        %v1238 = vmul.f32 %v470, %v854
        %v1239 = vmul.f32 %v471, %v855
        %v1240 = vmul.f32 %v472, %v856
        %v1241 = vmul.f32 %v473, %v857
        %v1242 = vmul.f32 %v474, %v858
        %v1243 = vmul.f32 %v475, %v859
        %v1244 = vmul.f32 %v476, %v860
        %v1245 = vmul.f32 %v477, %v861
        %v1246 = vmul.f32 %v478, %v862
        %v1247 = vmul.f32 %v479, %v863
        %v1248 = vmul.f32 %v480, %v864
        %v1249 = vmul.f32 %v481, %v865
        %v1250 = vmul.f32 %v482, %v866
        %v1251 = vmul.f32 %v483, %v867
        %v1252 = vmul.f32 %v484, %v868
        %v1253 = vmul.f32 %v485, %v869
        %v1254 = vmul.f32 %v486, %v870
        %v1255 = vmul.f32 %v487, %v871
        %v1256 = vmul.f32 %v488, %v872
        %v1257 = vmul.f32 %v489, %v873
        %v1258 = vmul.f32 %v490, %v874
        %v1259 = vmul.f32 %v491, %v875
        %v1260 = vmul.f32 %v492, %v876
        %v1261 = vmul.f32 %v493, %v877
        %v1262 = vmul.f32 %v494, %v878
        %v1263 = vmul.f32 %v495, %v879
        %v1264 = vmul.f32 %v496, %v880
        %v1265 = vmul.f32 %v497, %v881
        %v1266 = vmul.f32 %v498, %v882
        %v1267 = vmul.f32 %v499, %v883
        %v1268 = vmul.f32 %v500, %v884
        %v1269 = vmul.f32 %v501, %v885
        %v1270 = vmul.f32 %v502, %v886
        %v1271 = vmul.f32 %v503, %v887
        %v1272 = vmul.f32 %v504, %v888
        %v1273 = vmul.f32 %v505, %v889
        %v1274 = vmul.f32 %v506, %v890
        %v1275 = vmul.f32 %v507, %v891
        %v1276 = vmul.f32 %v508, %v892
        %v1277 = vmul.f32 %v509, %v893
        %v1278 = vmul.f32 %v510, %v894
        %v1279 = vmul.f32 %v511, %v895
        %v1280 = vmul.f32 %v512, %v896
        %v1281 = vmul.f32 %v513, %v897
        %v1282 = vmul.f32 %v514, %v898
        %v1283 = vmul.f32 %v515, %v899
        %v1284 = vmul.f32 %v516, %v900
        %v1285 = vmul.f32 %v517, %v901
        %v1286 = vmul.f32 %v518, %v902
        %v1287 = vmul.f32 %v519, %v903
        %v1288 = vmul.f32 %v520, %v904
        %v1289 = vmul.f32 %v521, %v905
        %v1290 = vmul.f32 %v522, %v906
        %v1291 = vmul.f32 %v523, %v907
        %v1292 = vmul.f32 %v524, %v908
        %v1293 = vmul.f32 %v525, %v909
        %v1294 = vmul.f32 %v526, %v910
        %v1295 = vmul.f32 %v527, %v911
        %v1296 = vmul.f32 %v528, %v912
        %v1297 = vmul.f32 %v529, %v913
        %v1298 = vmul.f32 %v530, %v914
        %v1299 = vmul.f32 %v531, %v915
        %v1300 = vmul.f32 %v532, %v916
        %v1301 = vmul.f32 %v533, %v917
        %v1302 = vmul.f32 %v534, %v918
        %v1303 = vmul.f32 %v535, %v919
        %v1304 = vmul.f32 %v536, %v920
        %v1305 = vmul.f32 %v537, %v921
        %v1306 = vmul.f32 %v538, %v922
        %v1307 = vmul.f32 %v539, %v923
        %v1308 = vmul.f32 %v540, %v924
        %v1309 = vmul.f32 %v541, %v925
        %v1310 = vmul.f32 %v542, %v926
        %v1311 = vmul.f32 %v543, %v927
        %v1312 = vmul.f32 %v544, %v928
        %v1313 = vmul.f32 %v545, %v929
        %v1314 = vmul.f32 %v546, %v930
        %v1315 = vmul.f32 %v547, %v931
        %v1316 = vmul.f32 %v548, %v932
        %v1317 = vmul.f32 %v549, %v933
        %v1318 = vmul.f32 %v550, %v934
        %v1319 = vmul.f32 %v551, %v935
        %v1320 = vmul.f32 %v552, %v936
        %v1321 = vmul.f32 %v553, %v937
        %v1322 = vmul.f32 %v554, %v938
        %v1323 = vmul.f32 %v555, %v939
        %v1324 = vmul.f32 %v556, %v940
        %v1325 = vmul.f32 %v557, %v941
        %v1326 = vmul.f32 %v558, %v942
        %v1327 = vmul.f32 %v559, %v943
        %v1328 = vmul.f32 %v560, %v944
        %v1329 = vmul.f32 %v561, %v945
        %v1330 = vmul.f32 %v562, %v946
        %v1331 = vmul.f32 %v563, %v947
        %v1332 = vmul.f32 %v564, %v948
        %v1333 = vmul.f32 %v565, %v949
        %v1334 = vmul.f32 %v566, %v950
        %v1335 = vmul.f32 %v567, %v951
        %v1336 = vmul.f32 %v568, %v952
        %v1337 = vmul.f32 %v569, %v953
        %v1338 = vmul.f32 %v570, %v954
        %v1339 = vmul.f32 %v571, %v955
        %v1340 = vmul.f32 %v572, %v956
        %v1341 = vmul.f32 %v573, %v957
        %v1342 = vmul.f32 %v574, %v958
        %v1343 = vmul.f32 %v575, %v959
        %v1344 = vmul.f32 %v576, %v960
        %v1345 = vmul.f32 %v577, %v961
        %v1346 = vmul.f32 %v578, %v962
        %v1347 = vmul.f32 %v579, %v963
        %v1348 = vmul.f32 %v580, %v964
        %v1349 = vmul.f32 %v581, %v965
        %v1350 = vmul.f32 %v582, %v966
        %v1351 = vmul.f32 %v583, %v967
        %v1352 = vmul.f32 %v584, %v968
        %v1353 = vmul.f32 %v585, %v969
        %v1354 = vmul.f32 %v586, %v970
        %v1355 = vmul.f32 %v587, %v971
        %v1356 = vmul.f32 %v588, %v972
        %v1357 = vmul.f32 %v589, %v973
        %v1358 = vmul.f32 %v590, %v974
        %v1359 = vmul.f32 %v591, %v975
        %v1360 = vmul.f32 %v592, %v976
        %v1361 = vmul.f32 %v593, %v977
        %v1362 = vmul.f32 %v594, %v978
        %v1363 = vmul.f32 %v595, %v979
        %v1364 = vmul.f32 %v596, %v980
        %v1365 = vmul.f32 %v597, %v981
        %v1366 = vmul.f32 %v598, %v982
        %v1367 = vmul.f32 %v599, %v983
        %v1368 = vmul.f32 %v600, %v984
        %v1369 = vmul.f32 %v601, %v985
        %v1370 = vmul.f32 %v602, %v986
        %v1371 = vmul.f32 %v603, %v987
        %v1372 = vmul.f32 %v604, %v988
        %v1373 = vmul.f32 %v605, %v989
        %v1374 = vmul.f32 %v606, %v990
        %v1375 = vmul.f32 %v607, %v991
        %v1376 = vmul.f32 %v608, %v992
        %v1377 = vmul.f32 %v609, %v993
        %v1378 = vmul.f32 %v610, %v994
        %v1379 = vmul.f32 %v611, %v995
        %v1380 = vmul.f32 %v612, %v996
        %v1381 = vmul.f32 %v613, %v997
        %v1382 = vmul.f32 %v614, %v998
        %v1383 = vmul.f32 %v615, %v999
        %v1384 = vmul.f32 %v616, %v1000
        %v1385 = vmul.f32 %v617, %v1001
        %v1386 = vmul.f32 %v618, %v1002
        %v1387 = vmul.f32 %v619, %v1003
        %v1388 = vmul.f32 %v620, %v1004
        %v1389 = vmul.f32 %v621, %v1005
        %v1390 = vmul.f32 %v622, %v1006
        %v1391 = vmul.f32 %v623, %v1007
        %v1392 = vmul.f32 %v624, %v1008
        %v1393 = vmul.f32 %v625, %v1009
        %v1394 = vmul.f32 %v626, %v1010
        %v1395 = vmul.f32 %v627, %v1011
        %v1396 = vmul.f32 %v628, %v1012
        %v1397 = vmul.f32 %v629, %v1013
        %v1398 = vmul.f32 %v630, %v1014
        %v1399 = vmul.f32 %v631, %v1015
        %v1400 = vmul.f32 %v632, %v1016
        %v1401 = vmul.f32 %v633, %v1017
        %v1402 = vmul.f32 %v634, %v1018
        %v1403 = vmul.f32 %v635, %v1019
        %v1404 = vmul.f32 %v636, %v1020
        %v1405 = vmul.f32 %v637, %v1021
        %v1406 = vmul.f32 %v638, %v1022
        %v1407 = vmul.f32 %v639, %v1023
        %v1408 = vmul.f32 %v640, %v1024
        %v1409 = vmul.f32 %v641, %v1025
        %v1410 = vmul.f32 %v642, %v1026
        %v1411 = vmul.f32 %v643, %v1027
        %v1412 = vmul.f32 %v644, %v1028
        %v1413 = vmul.f32 %v645, %v1029
        %v1414 = vmul.f32 %v646, %v1030
        %v1415 = vld [vmem:[#allocation2] sm:$0xff]
        %v1416 = vld [vmem:[#allocation2 + $0x8] sm:$0xff]
        %v1417 = vld [vmem:[#allocation2 + $0x10] sm:$0xff]
        %v1418 = vld [vmem:[#allocation2 + $0x18] sm:$0xff]
        %v1419 = vadd.f32 %v1031, %v1035
        %v1420 = vadd.f32 %v1419, %v1039
        %v1421 = vadd.f32 %v1420, %v1043
        %v1422 = vadd.f32 %v1421, %v1047
        %v1423 = vadd.f32 %v1422, %v1051
        %v1424 = vadd.f32 %v1423, %v1055
        %v1425 = vadd.f32 %v1424, %v1059
        %v1426 = vadd.f32 %v1425, %v1063
        %v1427 = vadd.f32 %v1426, %v1067
        %v1428 = vadd.f32 %v1427, %v1071
        %v1429 = vadd.f32 %v1428, %v1075
        %v1430 = vadd.f32 %v1429, %v1079
        %v1431 = vadd.f32 %v1430, %v1083
        %v1432 = vadd.f32 %v1431, %v1087
        %v1433 = vadd.f32 %v1432, %v1091
        %v1434 = vadd.f32 %v1433, %v1095
        %v1435 = vadd.f32 %v1434, %v1099
        %v1436 = vadd.f32 %v1435, %v1103
        %v1437 = vadd.f32 %v1436, %v1107
        %v1438 = vadd.f32 %v1437, %v1111
        %v1439 = vadd.f32 %v1438, %v1115
        %v1440 = vadd.f32 %v1439, %v1119
        %v1441 = vadd.f32 %v1440, %v1123
        %v1442 = vadd.f32 %v1441, %v1127
        %v1443 = vadd.f32 %v1442, %v1131
        %v1444 = vadd.f32 %v1443, %v1135
        %v1445 = vadd.f32 %v1444, %v1139
        %v1446 = vadd.f32 %v1445, %v1143
        %v1447 = vadd.f32 %v1446, %v1147
        %v1448 = vadd.f32 %v1447, %v1151
        %v1449 = vadd.f32 %v1448, %v1155
        %v1450 = vadd.f32 %v1449, %v1159
        %v1451 = vadd.f32 %v1450, %v1163
        %v1452 = vadd.f32 %v1451, %v1167
        %v1453 = vadd.f32 %v1452, %v1171
        %v1454 = vadd.f32 %v1453, %v1175
        %v1455 = vadd.f32 %v1454, %v1179
        %v1456 = vadd.f32 %v1455, %v1183
        %v1457 = vadd.f32 %v1456, %v1187
        %v1458 = vadd.f32 %v1457, %v1191
        %v1459 = vadd.f32 %v1458, %v1195
        %v1460 = vadd.f32 %v1459, %v1199
        %v1461 = vadd.f32 %v1460, %v1203
        %v1462 = vadd.f32 %v1461, %v1207
        %v1463 = vadd.f32 %v1462, %v1211
        %v1464 = vadd.f32 %v1463, %v1215
        %v1465 = vadd.f32 %v1464, %v1219
        %v1466 = vadd.f32 %v1465, %v1223
        %v1467 = vadd.f32 %v1466, %v1227
        %v1468 = vadd.f32 %v1467, %v1231
        %v1469 = vadd.f32 %v1468, %v1235
        %v1470 = vadd.f32 %v1469, %v1239
        %v1471 = vadd.f32 %v1470, %v1243
        %v1472 = vadd.f32 %v1471, %v1247
        %v1473 = vadd.f32 %v1472, %v1251
        %v1474 = vadd.f32 %v1473, %v1255
        %v1475 = vadd.f32 %v1474, %v1259
        %v1476 = vadd.f32 %v1475, %v1263
        %v1477 = vadd.f32 %v1476, %v1267
        %v1478 = vadd.f32 %v1477, %v1271
        %v1479 = vadd.f32 %v1478, %v1275
        %v1480 = vadd.f32 %v1479, %v1279
        %v1481 = vadd.f32 %v1480, %v1283
        %v1482 = vadd.f32 %v1481, %v1287
        %v1483 = vadd.f32 %v1482, %v1291
        %v1484 = vadd.f32 %v1483, %v1295
        %v1485 = vadd.f32 %v1484, %v1299
        %v1486 = vadd.f32 %v1485, %v1303
        %v1487 = vadd.f32 %v1486, %v1307
        %v1488 = vadd.f32 %v1487, %v1311
        %v1489 = vadd.f32 %v1488, %v1315
        %v1490 = vadd.f32 %v1489, %v1319
        %v1491 = vadd.f32 %v1490, %v1323
        %v1492 = vadd.f32 %v1491, %v1327
        %v1493 = vadd.f32 %v1492, %v1331
        %v1494 = vadd.f32 %v1493, %v1335
        %v1495 = vadd.f32 %v1494, %v1339
        %v1496 = vadd.f32 %v1495, %v1343
        %v1497 = vadd.f32 %v1496, %v1347
        %v1498 = vadd.f32 %v1497, %v1351
        %v1499 = vadd.f32 %v1498, %v1355
        %v1500 = vadd.f32 %v1499, %v1359
        %v1501 = vadd.f32 %v1500, %v1363
        %v1502 = vadd.f32 %v1501, %v1367
        %v1503 = vadd.f32 %v1502, %v1371
        %v1504 = vadd.f32 %v1503, %v1375
        %v1505 = vadd.f32 %v1504, %v1379
        %v1506 = vadd.f32 %v1505, %v1383
        %v1507 = vadd.f32 %v1506, %v1387
        %v1508 = vadd.f32 %v1507, %v1391
        %v1509 = vadd.f32 %v1508, %v1395
        %v1510 = vadd.f32 %v1509, %v1399
        %v1511 = vadd.f32 %v1510, %v1403
        %v1512 = vadd.f32 %v1511, %v1407
        %v1513 = vadd.f32 %v1512, %v1411
        %v1514 = vadd.f32 %v1032, %v1036
        %v1515 = vadd.f32 %v1514, %v1040
        %v1516 = vadd.f32 %v1515, %v1044
        %v1517 = vadd.f32 %v1516, %v1048
        %v1518 = vadd.f32 %v1517, %v1052
        %v1519 = vadd.f32 %v1518, %v1056
        %v1520 = vadd.f32 %v1519, %v1060
        %v1521 = vadd.f32 %v1520, %v1064
        %v1522 = vadd.f32 %v1521, %v1068
        %v1523 = vadd.f32 %v1522, %v1072
        %v1524 = vadd.f32 %v1523, %v1076
        %v1525 = vadd.f32 %v1524, %v1080
        %v1526 = vadd.f32 %v1525, %v1084
        %v1527 = vadd.f32 %v1526, %v1088
        %v1528 = vadd.f32 %v1527, %v1092
        %v1529 = vadd.f32 %v1528, %v1096
        %v1530 = vadd.f32 %v1529, %v1100
        %v1531 = vadd.f32 %v1530, %v1104
        %v1532 = vadd.f32 %v1531, %v1108
        %v1533 = vadd.f32 %v1532, %v1112
        %v1534 = vadd.f32 %v1533, %v1116
        %v1535 = vadd.f32 %v1534, %v1120
        %v1536 = vadd.f32 %v1535, %v1124
        %v1537 = vadd.f32 %v1536, %v1128
        %v1538 = vadd.f32 %v1537, %v1132
        %v1539 = vadd.f32 %v1538, %v1136
        %v1540 = vadd.f32 %v1539, %v1140
        %v1541 = vadd.f32 %v1540, %v1144
        %v1542 = vadd.f32 %v1541, %v1148
        %v1543 = vadd.f32 %v1542, %v1152
        %v1544 = vadd.f32 %v1543, %v1156
        %v1545 = vadd.f32 %v1544, %v1160
        %v1546 = vadd.f32 %v1545, %v1164
        %v1547 = vadd.f32 %v1546, %v1168
        %v1548 = vadd.f32 %v1547, %v1172
        %v1549 = vadd.f32 %v1548, %v1176
        %v1550 = vadd.f32 %v1549, %v1180
        %v1551 = vadd.f32 %v1550, %v1184
        %v1552 = vadd.f32 %v1551, %v1188
        %v1553 = vadd.f32 %v1552, %v1192
        %v1554 = vadd.f32 %v1553, %v1196
        %v1555 = vadd.f32 %v1554, %v1200
        %v1556 = vadd.f32 %v1555, %v1204
        %v1557 = vadd.f32 %v1556, %v1208
        %v1558 = vadd.f32 %v1557, %v1212
        %v1559 = vadd.f32 %v1558, %v1216
        %v1560 = vadd.f32 %v1559, %v1220
        %v1561 = vadd.f32 %v1560, %v1224
        %v1562 = vadd.f32 %v1561, %v1228
        %v1563 = vadd.f32 %v1562, %v1232
        %v1564 = vadd.f32 %v1563, %v1236
        %v1565 = vadd.f32 %v1564, %v1240
        %v1566 = vadd.f32 %v1565, %v1244
        %v1567 = vadd.f32 %v1566, %v1248
        %v1568 = vadd.f32 %v1567, %v1252
        %v1569 = vadd.f32 %v1568, %v1256
        %v1570 = vadd.f32 %v1569, %v1260
        %v1571 = vadd.f32 %v1570, %v1264
        %v1572 = vadd.f32 %v1571, %v1268
        %v1573 = vadd.f32 %v1572, %v1272
        %v1574 = vadd.f32 %v1573, %v1276
        %v1575 = vadd.f32 %v1574, %v1280
        %v1576 = vadd.f32 %v1575, %v1284
        %v1577 = vadd.f32 %v1576, %v1288
        %v1578 = vadd.f32 %v1577, %v1292
        %v1579 = vadd.f32 %v1578, %v1296
        %v1580 = vadd.f32 %v1579, %v1300
        %v1581 = vadd.f32 %v1580, %v1304
        %v1582 = vadd.f32 %v1581, %v1308
        %v1583 = vadd.f32 %v1582, %v1312
        %v1584 = vadd.f32 %v1583, %v1316
        %v1585 = vadd.f32 %v1584, %v1320
        %v1586 = vadd.f32 %v1585, %v1324
        %v1587 = vadd.f32 %v1586, %v1328
        %v1588 = vadd.f32 %v1587, %v1332
        %v1589 = vadd.f32 %v1588, %v1336
        %v1590 = vadd.f32 %v1589, %v1340
        %v1591 = vadd.f32 %v1590, %v1344
        %v1592 = vadd.f32 %v1591, %v1348
        %v1593 = vadd.f32 %v1592, %v1352
        %v1594 = vadd.f32 %v1593, %v1356
        %v1595 = vadd.f32 %v1594, %v1360
        %v1596 = vadd.f32 %v1595, %v1364
        %v1597 = vadd.f32 %v1596, %v1368
        %v1598 = vadd.f32 %v1597, %v1372
        %v1599 = vadd.f32 %v1598, %v1376
        %v1600 = vadd.f32 %v1599, %v1380
        %v1601 = vadd.f32 %v1600, %v1384
        %v1602 = vadd.f32 %v1601, %v1388
        %v1603 = vadd.f32 %v1602, %v1392
        %v1604 = vadd.f32 %v1603, %v1396
        %v1605 = vadd.f32 %v1604, %v1400
        %v1606 = vadd.f32 %v1605, %v1404
        %v1607 = vadd.f32 %v1606, %v1408
        %v1608 = vadd.f32 %v1607, %v1412
        %v1609 = vadd.f32 %v1033, %v1037
        %v1610 = vadd.f32 %v1609, %v1041
        %v1611 = vadd.f32 %v1610, %v1045
        %v1612 = vadd.f32 %v1611, %v1049
        %v1613 = vadd.f32 %v1612, %v1053
        %v1614 = vadd.f32 %v1613, %v1057
        %v1615 = vadd.f32 %v1614, %v1061
        %v1616 = vadd.f32 %v1615, %v1065
        %v1617 = vadd.f32 %v1616, %v1069
        %v1618 = vadd.f32 %v1617, %v1073
        %v1619 = vadd.f32 %v1618, %v1077
        %v1620 = vadd.f32 %v1619, %v1081
        %v1621 = vadd.f32 %v1620, %v1085
        %v1622 = vadd.f32 %v1621, %v1089
        %v1623 = vadd.f32 %v1622, %v1093
        %v1624 = vadd.f32 %v1623, %v1097
        %v1625 = vadd.f32 %v1624, %v1101
        %v1626 = vadd.f32 %v1625, %v1105
        %v1627 = vadd.f32 %v1626, %v1109
        %v1628 = vadd.f32 %v1627, %v1113
        %v1629 = vadd.f32 %v1628, %v1117
        %v1630 = vadd.f32 %v1629, %v1121
        %v1631 = vadd.f32 %v1630, %v1125
        %v1632 = vadd.f32 %v1631, %v1129
        %v1633 = vadd.f32 %v1632, %v1133
        %v1634 = vadd.f32 %v1633, %v1137
        %v1635 = vadd.f32 %v1634, %v1141
        %v1636 = vadd.f32 %v1635, %v1145
        %v1637 = vadd.f32 %v1636, %v1149
        %v1638 = vadd.f32 %v1637, %v1153
        %v1639 = vadd.f32 %v1638, %v1157
        %v1640 = vadd.f32 %v1639, %v1161
        %v1641 = vadd.f32 %v1640, %v1165
        %v1642 = vadd.f32 %v1641, %v1169
        %v1643 = vadd.f32 %v1642, %v1173
        %v1644 = vadd.f32 %v1643, %v1177
        %v1645 = vadd.f32 %v1644, %v1181
        %v1646 = vadd.f32 %v1645, %v1185
        %v1647 = vadd.f32 %v1646, %v1189
        %v1648 = vadd.f32 %v1647, %v1193
        %v1649 = vadd.f32 %v1648, %v1197
        %v1650 = vadd.f32 %v1649, %v1201
        %v1651 = vadd.f32 %v1650, %v1205
        %v1652 = vadd.f32 %v1651, %v1209
        %v1653 = vadd.f32 %v1652, %v1213
        %v1654 = vadd.f32 %v1653, %v1217
        %v1655 = vadd.f32 %v1654, %v1221
        %v1656 = vadd.f32 %v1655, %v1225
        %v1657 = vadd.f32 %v1656, %v1229
        %v1658 = vadd.f32 %v1657, %v1233
        %v1659 = vadd.f32 %v1658, %v1237
        %v1660 = vadd.f32 %v1659, %v1241
        %v1661 = vadd.f32 %v1660, %v1245
        %v1662 = vadd.f32 %v1661, %v1249
        %v1663 = vadd.f32 %v1662, %v1253
        %v1664 = vadd.f32 %v1663, %v1257
        %v1665 = vadd.f32 %v1664, %v1261
        %v1666 = vadd.f32 %v1665, %v1265
        %v1667 = vadd.f32 %v1666, %v1269
        %v1668 = vadd.f32 %v1667, %v1273
        %v1669 = vadd.f32 %v1668, %v1277
        %v1670 = vadd.f32 %v1669, %v1281
        %v1671 = vadd.f32 %v1670, %v1285
        %v1672 = vadd.f32 %v1671, %v1289
        %v1673 = vadd.f32 %v1672, %v1293
        %v1674 = vadd.f32 %v1673, %v1297
        %v1675 = vadd.f32 %v1674, %v1301
        %v1676 = vadd.f32 %v1675, %v1305
        %v1677 = vadd.f32 %v1676, %v1309
        %v1678 = vadd.f32 %v1677, %v1313
        %v1679 = vadd.f32 %v1678, %v1317
        %v1680 = vadd.f32 %v1679, %v1321
        %v1681 = vadd.f32 %v1680, %v1325
        %v1682 = vadd.f32 %v1681, %v1329
        %v1683 = vadd.f32 %v1682, %v1333
        %v1684 = vadd.f32 %v1683, %v1337
        %v1685 = vadd.f32 %v1684, %v1341
        %v1686 = vadd.f32 %v1685, %v1345
        %v1687 = vadd.f32 %v1686, %v1349
        %v1688 = vadd.f32 %v1687, %v1353
        %v1689 = vadd.f32 %v1688, %v1357
        %v1690 = vadd.f32 %v1689, %v1361
        %v1691 = vadd.f32 %v1690, %v1365
        %v1692 = vadd.f32 %v1691, %v1369
        %v1693 = vadd.f32 %v1692, %v1373
        %v1694 = vadd.f32 %v1693, %v1377
        %v1695 = vadd.f32 %v1694, %v1381
        %v1696 = vadd.f32 %v1695, %v1385
        %v1697 = vadd.f32 %v1696, %v1389
        %v1698 = vadd.f32 %v1697, %v1393
        %v1699 = vadd.f32 %v1698, %v1397
        %v1700 = vadd.f32 %v1699, %v1401
        %v1701 = vadd.f32 %v1700, %v1405
        %v1702 = vadd.f32 %v1701, %v1409
        %v1703 = vadd.f32 %v1702, %v1413
        %v1704 = vadd.f32 %v1034, %v1038
        %v1705 = vadd.f32 %v1704, %v1042
        %v1706 = vadd.f32 %v1705, %v1046
        %v1707 = vadd.f32 %v1706, %v1050
        %v1708 = vadd.f32 %v1707, %v1054
        %v1709 = vadd.f32 %v1708, %v1058
        %v1710 = vadd.f32 %v1709, %v1062
        %v1711 = vadd.f32 %v1710, %v1066
        %v1712 = vadd.f32 %v1711, %v1070
        %v1713 = vadd.f32 %v1712, %v1074
        %v1714 = vadd.f32 %v1713, %v1078
        %v1715 = vadd.f32 %v1714, %v1082
        %v1716 = vadd.f32 %v1715, %v1086
        %v1717 = vadd.f32 %v1716, %v1090
        %v1718 = vadd.f32 %v1717, %v1094
        %v1719 = vadd.f32 %v1718, %v1098
        %v1720 = vadd.f32 %v1719, %v1102
        %v1721 = vadd.f32 %v1720, %v1106
        %v1722 = vadd.f32 %v1721, %v1110
        %v1723 = vadd.f32 %v1722, %v1114
        %v1724 = vadd.f32 %v1723, %v1118
        %v1725 = vadd.f32 %v1724, %v1122
        %v1726 = vadd.f32 %v1725, %v1126
        %v1727 = vadd.f32 %v1726, %v1130
        %v1728 = vadd.f32 %v1727, %v1134
        %v1729 = vadd.f32 %v1728, %v1138
        %v1730 = vadd.f32 %v1729, %v1142
        %v1731 = vadd.f32 %v1730, %v1146
        %v1732 = vadd.f32 %v1731, %v1150
        %v1733 = vadd.f32 %v1732, %v1154
        %v1734 = vadd.f32 %v1733, %v1158
        %v1735 = vadd.f32 %v1734, %v1162
        %v1736 = vadd.f32 %v1735, %v1166
        %v1737 = vadd.f32 %v1736, %v1170
        %v1738 = vadd.f32 %v1737, %v1174
        %v1739 = vadd.f32 %v1738, %v1178
        %v1740 = vadd.f32 %v1739, %v1182
        %v1741 = vadd.f32 %v1740, %v1186
        %v1742 = vadd.f32 %v1741, %v1190
        %v1743 = vadd.f32 %v1742, %v1194
        %v1744 = vadd.f32 %v1743, %v1198
        %v1745 = vadd.f32 %v1744, %v1202
        %v1746 = vadd.f32 %v1745, %v1206
        %v1747 = vadd.f32 %v1746, %v1210
        %v1748 = vadd.f32 %v1747, %v1214
        %v1749 = vadd.f32 %v1748, %v1218
        %v1750 = vadd.f32 %v1749, %v1222
        %v1751 = vadd.f32 %v1750, %v1226
        %v1752 = vadd.f32 %v1751, %v1230
        %v1753 = vadd.f32 %v1752, %v1234
        %v1754 = vadd.f32 %v1753, %v1238
        %v1755 = vadd.f32 %v1754, %v1242
        %v1756 = vadd.f32 %v1755, %v1246
        %v1757 = vadd.f32 %v1756, %v1250
        %v1758 = vadd.f32 %v1757, %v1254
        %v1759 = vadd.f32 %v1758, %v1258
        %v1760 = vadd.f32 %v1759, %v1262
        %v1761 = vadd.f32 %v1760, %v1266
        %v1762 = vadd.f32 %v1761, %v1270
        %v1763 = vadd.f32 %v1762, %v1274
        %v1764 = vadd.f32 %v1763, %v1278
        %v1765 = vadd.f32 %v1764, %v1282
        %v1766 = vadd.f32 %v1765, %v1286
        %v1767 = vadd.f32 %v1766, %v1290
        %v1768 = vadd.f32 %v1767, %v1294
        %v1769 = vadd.f32 %v1768, %v1298
        %v1770 = vadd.f32 %v1769, %v1302
        %v1771 = vadd.f32 %v1770, %v1306
        %v1772 = vadd.f32 %v1771, %v1310
        %v1773 = vadd.f32 %v1772, %v1314
        %v1774 = vadd.f32 %v1773, %v1318
        %v1775 = vadd.f32 %v1774, %v1322
        %v1776 = vadd.f32 %v1775, %v1326
        %v1777 = vadd.f32 %v1776, %v1330
        %v1778 = vadd.f32 %v1777, %v1334
        %v1779 = vadd.f32 %v1778, %v1338
        %v1780 = vadd.f32 %v1779, %v1342
        %v1781 = vadd.f32 %v1780, %v1346
        %v1782 = vadd.f32 %v1781, %v1350
        %v1783 = vadd.f32 %v1782, %v1354
        %v1784 = vadd.f32 %v1783, %v1358
        %v1785 = vadd.f32 %v1784, %v1362
        %v1786 = vadd.f32 %v1785, %v1366
        %v1787 = vadd.f32 %v1786, %v1370
        %v1788 = vadd.f32 %v1787, %v1374
        %v1789 = vadd.f32 %v1788, %v1378
        %v1790 = vadd.f32 %v1789, %v1382
        %v1791 = vadd.f32 %v1790, %v1386
        %v1792 = vadd.f32 %v1791, %v1390
        %v1793 = vadd.f32 %v1792, %v1394
        %v1794 = vadd.f32 %v1793, %v1398
        %v1795 = vadd.f32 %v1794, %v1402
        %v1796 = vadd.f32 %v1795, %v1406
        %v1797 = vadd.f32 %v1796, %v1410
        %v1798 = vadd.f32 %v1797, %v1414
        %v1799 = vadd.f32 %v1415, %v1513
        %v1800 = vadd.f32 %v1416, %v1608
        %v1801 = vadd.f32 %v1417, %v1703
        %v1802 = vadd.f32 %v1418, %v1798
        %1803 = vst [vmem:[#allocation2] sm:$0xff] %v1799
        %1804 = vst [vmem:[#allocation2 + $0x8] sm:$0xff] %v1800
        %1805 = vst [vmem:[#allocation2 + $0x10] sm:$0xff] %v1801
        %1806 = vst [vmem:[#allocation2 + $0x18] sm:$0xff] %v1802
        // Predicated region
        $region41: #{tpu_custom_call.1} parent=27 // pred_check
          %p1807 = pneg %p255
        $region42: #{tpu_custom_call.1} parent=27 // pred_check_branch
          %1809 = sbr.rel (%p1807) target = $region44
        $region43: #{tpu_custom_call.1} parent=27 // pred_region
          %v1810 = vld [vmem:[#allocation2] sm:$0xff]
          %v1811 = vld [vmem:[#allocation2 + $0x8] sm:$0xff]
          %v1812 = vld [vmem:[#allocation2 + $0x10] sm:$0xff]
          %v1813 = vld [vmem:[#allocation2 + $0x18] sm:$0xff]
          %v1814 = vrot.slane %v1810, 4
          %v1815 = vadd.f32 %v1810, %v1814
          %v1816 = vrot.slane %v1815, 2
          %v1817 = vadd.f32 %v1815, %v1816
          %v1818 = vrot.slane %v1817, 1
          %v1819 = vadd.f32 %v1817, %v1818
          %v1820 = vrot.slane %v1811, 4
          %v1821 = vadd.f32 %v1811, %v1820
          %v1822 = vrot.slane %v1821, 2
          %v1823 = vadd.f32 %v1821, %v1822
          %v1824 = vrot.slane %v1823, 1
          %v1825 = vadd.f32 %v1823, %v1824
          %v1826 = vrot.slane %v1812, 4
          %v1827 = vadd.f32 %v1812, %v1826
          %v1828 = vrot.slane %v1827, 2
          %v1829 = vadd.f32 %v1827, %v1828
          %v1830 = vrot.slane %v1829, 1
          %v1831 = vadd.f32 %v1829, %v1830
          %v1832 = vrot.slane %v1813, 4
          %v1833 = vadd.f32 %v1813, %v1832
          %v1834 = vrot.slane %v1833, 2
          %v1835 = vadd.f32 %v1833, %v1834
          %v1836 = vrot.slane %v1835, 1
          %v1837 = vadd.f32 %v1835, %v1836
          %v1842 = vcombine.low %v1819, %v1825
          %v1843 = vcombine.low %v1831, %v1837
          %v1845 = vunpack.c.l.s4 1966171168
          %v1846 = vunpack.c.0.s8 %v1845
          %v1847 = vlaneseq
          %v1848 = vshrl.u32 %v1847, 7
          %v1849 = vsub.s32 %v1846, %v1848
          %v1850 = vrot.slane %v1842, %v1849
          %v1852 = vunpack.c.l.s4 1966171168
          %v1853 = vunpack.c.0.s8 %v1852
          %v1854 = vlaneseq
          %v1855 = vshrl.u32 %v1854, 7
          %v1856 = vsub.s32 %v1853, %v1855
          %v1857 = vrot.slane %v1843, %v1856
          %v1858 = vcombine.low %v1850, %v1857
          %v1860 = vunpack.c.l.s4 1966171168
          %v1861 = vunpack.c.0.s8 %v1860
          %v1862 = vlaneseq
          %v1863 = vshrl.u32 %v1862, 7
          %v1864 = vsub.s32 %v1861, %v1863
          %v1865 = vrot.slane %v1858, %v1864
          %v1867 = vlaneseq
          %vm1868 = vcmp.ge.s32.totalorder %v1867, 0
          %vm1869 = vcmp.lt.s32.totalorder %v1867, 512
          %vm1870 = vmand %vm1868, %vm1869
          %1871 = vst.msk [vmem:[%s237] sm:$0xf] %vm1870, %v1865
        $region44: #{tpu_custom_call.1} parent=27 // pred_fallthru
          _
        %s1872 = sand.u32 %s98, 1
        %s1873 = scalar_lea.sflag [#allocation5], %s1872
        %s1874 = sand.u32 %s98, 1
        %s1875 = smul.addr %s1874, 4
        %s1876 = scalar_lea.vmem [#allocation8], %s1875
        // Predicated region
        $region45: #{tpu_custom_call.1} parent=27 // pred_check
          %p1877 = pneg %p108
        $region46: #{tpu_custom_call.1} parent=27 // pred_check_branch
          %1879 = sbr.rel (%p1877) target = $region48
        $region47: #{tpu_custom_call.1} parent=27 // pred_region
          %s1880 = smul.u32 4, %s26
          %s1881 = ssub.s32 5, %s1880
          %p1882 = scmp.lt.s32.totalorder %s1881, 4
          %s1883 = scalar_select %p1882, %s1881, 4
          %s1884 = smul.u32 16, %s1883
          %s1886 = ssub.s32 64, %s1884
          %1887 = vsyncadd %s1873, %s1886
          %p1888 = scmp.ne.s32.totalorder 0, %s1884
          %s1889 = smul.addr %s1880, 16
          %s1890 = scalar_lea.hbm %s2, %s1889
          %s1891 = sshll.u32 %s1883, 4
          %s1892 = sshll.u32 %s1876, 4
          %s1893 = int_to_ptr.vmem [resolvable:$true] %s1892
          %1895 = dma.vmem_to_hbm [thread:$0]  (%p1888), %s1893, %s1891, %s1890, %s1873
        $region48: #{tpu_custom_call.1} parent=27 // pred_fallthru
          _
      $region28: #{tpu_custom_call.1} parent=5 // pred_fallthru
        _
      %p1896 = scmp.le.s32.totalorder 2, %s17
      // Predicated region
      $region49: #{tpu_custom_call.1} parent=5 // pred_check
        %p1897 = pneg %p1896
      $region50: #{tpu_custom_call.1} parent=5 // pred_check_branch
        %1899 = sbr.rel (%p1897) target = $region52
      $region51: #{tpu_custom_call.1} parent=5 // pred_region
        %s1900 = ssub.s32 %s17, 2
        // Predicated region
        $region53: #{tpu_custom_call.1} parent=51 // pred_check
          %p1901 = pneg %p114
        $region54: #{tpu_custom_call.1} parent=51 // pred_check_branch
          %1903 = sbr.rel (%p1901) target = $region56
        $region55: #{tpu_custom_call.1} parent=51 // pred_region
          %s1904 = sand.u32 %s99, 1
          %s1905 = scalar_lea.sflag [#allocation5], %s1904
          %s1906 = sand.u32 %s99, 1
          %s1907 = smul.addr %s1906, 4
          %s1908 = scalar_lea.vmem [#allocation8], %s1907
          %1909 = dma.done %s1905, 64
        $region56: #{tpu_custom_call.1} parent=51 // pred_fallthru
          _
      $region52: #{tpu_custom_call.1} parent=5 // pred_fallthru
        _
    $region6: #{tpu_custom_call.1} parent=1 // loop_footer
      %s21 = sadd.s32 1, %s17
    $region7: #{tpu_custom_call.1} parent=1 // loop_footer_branch
      %16 = sbr.rel target = $region3
    $region8: #{tpu_custom_call.1} parent=1 // loop_exit
      _
    %1910 = vsyncpa [#allocation4], 1
    %s1911 = scalar_lea.sflag [#allocation4], 1
    %1912 = vsyncpa %s1911, 1
    %1913 = vsyncpa [#allocation7], 1
    %s1914 = scalar_lea.sflag [#allocation7], 1
    %1915 = vsyncpa %s1914, 1
    %1916 = vsyncpa [#allocation5], 1
    %s1917 = scalar_lea.sflag [#allocation5], 1
    %1918 = vsyncpa %s1917, 1

</llo_original>
